<compile_context>
chip_gen: v6e
topology: v6e:2x2x1
jax: 0.10.0
libtpu: 0.0.40
codegen_flags: <defaults>
</compile_context>

<pallas_src>
import functools
import math

import numpy as np
import jax
import jax.numpy as jnp
from jax import lax
from jax.experimental import pallas as pl
from jax.experimental.pallas import tpu as pltpu


# ----------------------------- configuration --------------------------------
class Cfg:
    revin = True
    seq_len = 16
    pred_len = 8
    d_deep = 8
    individual = False
    enc_in = 8            # channels
    attention_type = "full"
    d_model = 32
    n_heads = 2
    d_ff = 64
    e_layers = 2
    dropout = 0.0
    use_modrelu = False
    use_layernorm = False
    activation = "relu"


# ------------------------------ fused Pallas kernel --------------------------
def _fused_kernel(x_ref,
                  wfront_ref, bfront_ref,
                  wemb_ref, bemb_ref,
                  wqkv_ref, bqkv_ref,
                  wo_ref, bo_ref,
                  wf1_ref, bf1_ref,
                  wf2_ref, bf2_ref,
                  wtail_ref, btail_ref,
                  out_ref,
                  *, seq_len, d_model, n_heads, e_layers, channels,
                  samples_per_block):
    """One grid step == `samples_per_block` samples.  Each row of the block is
    one (sample, channel) series; features are packed [real | imag] on lanes."""
    f32 = jnp.float32
    D = d_model
    E = D // n_heads
    C = channels
    R = samples_per_block * C

    # ---------------- RevIN (per row) ----------------
    x = x_ref[...]                                              # (R, L)
    mean = jnp.mean(x, axis=-1, keepdims=True)                  # (R, 1)
    xc = x - mean
    var = jnp.sum(xc * xc, axis=-1, keepdims=True) * (1.0 / (seq_len - 1)) + 1e-5
    inv_std = lax.rsqrt(var)                                    # EUP
    std = var * inv_std                                         # == sqrt(var)
    xn = xc * inv_std

    # ------- front end: time_proj + rFFT(x) + rFFT(z) + concat (folded) -------
    spec = jnp.dot(xn, wfront_ref[...], preferred_element_type=f32) + bfront_ref[...]

    # ------- complex enc_embedding, packed [real | imag] -------
    X = jnp.dot(spec, wemb_ref[...], preferred_element_type=f32) + bemb_ref[...]   # (R, 2D)

    # block-diagonal attention bias: tokens of different samples don't attend
    if samples_per_block > 1:
        rb = lax.broadcasted_iota(jnp.int32, (R, R), 0) // C
        cb = lax.broadcasted_iota(jnp.int32, (R, R), 1) // C
        attn_bias = jnp.where(rb == cb, 0.0, -1e30).astype(f32)
    else:
        attn_bias = None

    # ------------------------- encoder layers -------------------------
    for l in range(e_layers):
        # fused Q/K/V projection, head-major columns, scale folded into Q
        qkv = jnp.dot(X, wqkv_ref[l], preferred_element_type=f32) + bqkv_ref[l]     # (R, 6D)

        head_outs = []
        for h in range(n_heads):
            q0 = h * 2 * E
            Qh = qkv[:, q0: q0 + 2 * E]                          # [re | im] (R, 2E)
            Kh = qkv[:, 2 * D + q0: 2 * D + q0 + 2 * E]
            Vh = qkv[:, 4 * D + q0: 4 * D + q0 + 2 * E]
            # Re(Q . conj(K)^T) = Qr Kr^T + Qi Ki^T  -> one packed dot
            s = lax.dot_general(Qh, Kh, (((1,), (1,)), ((), ())),
                                preferred_element_type=f32)      # (R, R)
            if attn_bias is not None:
                s = s + attn_bias
            s = s - jnp.max(s, axis=-1, keepdims=True)
            p = jnp.exp(s)
            p = p / jnp.sum(p, axis=-1, keepdims=True)           # exact softmax
            head_outs.append(jnp.dot(p, Vh, preferred_element_type=f32))            # (R, 2E)

        A = jnp.concatenate(head_outs, axis=-1)                  # head-major (R, 2D)
        A = jnp.dot(A, wo_ref[l], preferred_element_type=f32) + bo_ref[l]
        X = X + A

        # complex FFN; complex ReLU == ReLU on the packed [re|im] slab
        Y = jnp.dot(X, wf1_ref[l], preferred_element_type=f32) + bf1_ref[l]
        Y = jnp.maximum(Y, 0.0)
        Y = jnp.dot(Y, wf2_ref[l], preferred_element_type=f32) + bf2_ref[l]
        X = X + Y

    # ---- tail: freq_proj + irFFT + length_ratio (folded) + RevIN de-norm ----
    low = jnp.dot(X, wtail_ref[...], preferred_element_type=f32) + btail_ref[...]   # (R, L+P)
    out_ref[...] = low * std + mean


_PACKED_KEYS = ("W_front", "b_front", "W_emb", "b_emb",
                "Wqkv", "bqkv", "Wo", "bo",
                "Wf1", "bf1", "Wf2", "bf2",
                "W_tail", "b_tail")


def comfreformer_forward(x, packed, cfg, *, target_rows=256):
    """Fused forward: x (B, L, C) -> (B, L+P, C)."""
    B, L, C = x.shape
    P = cfg.pred_len

    # samples per grid step: fill MXU rows (~256 on v6e/v7x, fine on v5e too)
    # but keep >= 2 grid steps when B >= 2 so the v7x megacore uses both cores.
    bb = max(1, min(B, target_rows // C))
    if B >= 2:
        bb = min(bb, pl.cdiv(B, 2))
    grid_len = pl.cdiv(B, bb)
    B_pad = grid_len * bb

    # wrapper-side layout plumbing: (B, L, C) -> (B_pad*C, L), time on lanes
    x_ct = jnp.transpose(x, (0, 2, 1)).astype(jnp.float32)       # (B, C, L)
    if B_pad != B:
        pad = jnp.zeros((B_pad - B, C, L), jnp.float32)
        x_ct = jnp.concatenate([x_ct, pad], axis=0)
    x_rows = x_ct.reshape(B_pad * C, L)

    weights = [packed[k] for k in _PACKED_KEYS]
    kernel = functools.partial(
        _fused_kernel,
        seq_len=L, d_model=cfg.d_model, n_heads=cfg.n_heads,
        e_layers=cfg.e_layers, channels=C, samples_per_block=bb)

    def wspec(a):
        zeros = (0,) * a.ndim
        return pl.BlockSpec(a.shape, lambda i, _z=zeros: _z)     # weights resident in VMEM

    Rb = bb * C
    y_rows = pl.pallas_call(
        kernel,
        grid=(grid_len,),
        in_specs=[pl.BlockSpec((Rb, L), lambda i: (i, 0))] + [wspec(w) for w in weights],
        out_specs=pl.BlockSpec((Rb, L + P), lambda i: (i, 0)),
        out_shape=jax.ShapeDtypeStruct((B_pad * C, L + P), jnp.float32),
        compiler_params=pltpu.CompilerParams(dimension_semantics=("parallel",)),
    )(x_rows, *weights)

    y = y_rows.reshape(B_pad, C, L + P)[:B]
    return jnp.transpose(y, (0, 2, 1))                           # (B, L+P, C)


# ------------------------------- parameters ----------------------------------
def init_params(cfg, key):
    keys = iter(jax.random.split(key, 128))

    def real_lin(in_f, out_f):
        w = jax.random.normal(next(keys), (in_f, out_f), jnp.float32) / math.sqrt(in_f)
        b = 0.02 * jax.random.normal(next(keys), (1, out_f), jnp.float32)
        return w, b

    def cplx_lin(in_f, out_f):
        wr, br = real_lin(in_f, out_f)
        wi, bi = real_lin(in_f, out_f)
        return (wr, wi, br, bi)

    input_dim = (cfg.seq_len // 2 + cfg.d_deep // 2 + 2) if cfg.d_deep > 0 \
        else (cfg.seq_len // 2 + 1)
    out_freq = (cfg.seq_len + cfg.pred_len) // 2 + 1

    params = {
        "time_proj": real_lin(cfg.seq_len, cfg.d_deep),
        "enc_embedding": cplx_lin(input_dim, cfg.d_model),
        "freq_proj": cplx_lin(cfg.d_model, out_freq),
        "layers": [],
    }
    for _ in range(cfg.e_layers):
        params["layers"].append({
            "wq": cplx_lin(cfg.d_model, cfg.d_model),
            "wk": cplx_lin(cfg.d_model, cfg.d_model),
            "wv": cplx_lin(cfg.d_model, cfg.d_model),
            "wo": cplx_lin(cfg.d_model, cfg.d_model),
            "ffn1": cplx_lin(cfg.d_model, cfg.d_ff),
            "ffn2": cplx_lin(cfg.d_ff, cfg.d_model),
        })
    return params


def pack_params(params, cfg):
    """Pack complex linears into single real matmuls, permute per-head blocks,
    and fold the rFFT/irFFT/time_proj/freq_proj/length-ratio into the weights."""
    assert cfg.d_deep > 0, "only the d_deep > 0 path is implemented"
    L, P, Dd = cfg.seq_len, cfg.pred_len, cfg.d_deep
    D, H = cfg.d_model, cfg.n_heads
    E = D // H
    scale = 1.0 / math.sqrt(E)

    def cpack(p):
        wr, wi, br, bi = p
        W = jnp.concatenate([jnp.concatenate([wr, wi], axis=1),
                             jnp.concatenate([-wi, wr], axis=1)], axis=0)   # (2K, 2N)
        b = jnp.concatenate([br, bi], axis=1)                               # (1, 2N)
        return W, b

    # head-major permutation of the packed [re(D)|im(D)] feature axis:
    #   -> [h0_re(E)|h0_im(E)|h1_re(E)|h1_im(E)|...]
    head_perm = np.concatenate(
        [np.concatenate([np.arange(h * E, (h + 1) * E),
                         D + np.arange(h * E, (h + 1) * E)]) for h in range(H)])

    # real DFT (rfft) matrices: Xr = x @ Cr, Xi = x @ Ci
    def rfft_mats(N):
        n = np.arange(N, dtype=np.float64)[:, None]
        k = np.arange(N // 2 + 1, dtype=np.float64)[None, :]
        ang = 2.0 * np.pi * n * k / N
        return (jnp.asarray(np.cos(ang), jnp.float32),
                jnp.asarray(-np.sin(ang), jnp.float32))

    # -- front end: fold time_proj (z = x @ Wt + bt) + rfft(x) + rfft(z) + concat --
    Cr_x, Ci_x = rfft_mats(L)                       # (L, L//2+1)
    Cr_z, Ci_z = rfft_mats(Dd)                      # (d_deep, d_deep//2+1)
    Wt, bt = params["time_proj"]                    # (L, d_deep), (1, d_deep)
    nfx = L // 2 + 1
    W_front = jnp.concatenate([Cr_x, Wt @ Cr_z, Ci_x, Wt @ Ci_z], axis=1)   # (L, 2*input_dim)
    zero = jnp.zeros((1, nfx), jnp.float32)
    b_front = jnp.concatenate([zero, bt @ Cr_z, zero, bt @ Ci_z], axis=1)   # (1, 2*input_dim)

    W_emb, b_emb = cpack(params["enc_embedding"])   # (2*input_dim, 2*d_model)

    # -- per-layer packs: Q/K/V fused + head-major columns, scale folded into Q --
    Wqkv, bqkv, Wo, bo, Wf1, bf1, Wf2, bf2 = ([] for _ in range(8))
    for lyr in params["layers"]:
        wq, bq = cpack(lyr["wq"])
        wk, bk = cpack(lyr["wk"])
        wv, bv = cpack(lyr["wv"])
        Wqkv.append(jnp.concatenate([wq[:, head_perm] * scale,
                                     wk[:, head_perm],
                                     wv[:, head_perm]], axis=1))
        bqkv.append(jnp.concatenate([bq[:, head_perm] * scale,
                                     bk[:, head_perm],
                                     bv[:, head_perm]], axis=1))
        w, b = cpack(lyr["wo"])
        Wo.append(w[head_perm, :])                  # rows permuted to head-major input
        bo.append(b)
        w, b = cpack(lyr["ffn1"]); Wf1.append(w); bf1.append(b)
        w, b = cpack(lyr["ffn2"]); Wf2.append(w); bf2.append(b)
    stack = lambda xs: jnp.stack(xs, axis=0)

    # -- tail: fold freq_proj + irFFT(length L+P) + length_ratio into one matmul --
    N_out = L + P
    F_out = N_out // 2 + 1
    k = np.arange(F_out, dtype=np.float64)[:, None]
    n = np.arange(N_out, dtype=np.float64)[None, :]
    ang = 2.0 * np.pi * k * n / N_out
    wgt = np.full((F_out, 1), 2.0)
    wgt[0, 0] = 1.0
    wgt[-1, 0] = 1.0                                # Nyquist (N_out even)
    A = wgt * np.cos(ang) / N_out                   # irfft: x = Xr @ A + Xi @ B
    Bm = -wgt * np.sin(ang) / N_out                 # rows 0 / Nyquist are 0 -> Im ignored
    W_irfft = jnp.asarray(np.concatenate([A, Bm], axis=0), jnp.float32)     # (2*F_out, N_out)
    Wfp, bfp = cpack(params["freq_proj"])           # (2*d_model, 2*F_out)
    ratio = (L + P) / L
    W_tail = (Wfp @ W_irfft) * ratio                # (2*d_model, L+P)
    b_tail = (bfp @ W_irfft) * ratio                # (1, L+P)

    return {
        "W_front": W_front, "b_front": b_front,
        "W_emb": W_emb, "b_emb": b_emb,
        "Wqkv": stack(Wqkv), "bqkv": stack(bqkv),
        "Wo": stack(Wo), "bo": stack(bo),
        "Wf1": stack(Wf1), "bf1": stack(bf1),
        "Wf2": stack(Wf2), "bf2": stack(bf2),
        "W_tail": W_tail, "b_tail": b_tail,
    }


# --------------------------- pure-JAX reference -------------------------------
def reference_forward(x, params, cfg):
    """Mirror of the PyTorch module (uses jnp.fft); used only for validation."""
    B, L, C = x.shape
    H, D = cfg.n_heads, cfg.d_model
    E = D // H

    x_mean = jnp.mean(x, axis=1, keepdims=True)
    xz = x - x_mean
    x_var = jnp.var(xz, axis=1, keepdims=True, ddof=1) + 1e-5
    xn = xz / jnp.sqrt(x_var)

    Wt, bt = params["time_proj"]
    z = jnp.transpose(jnp.transpose(xn, (0, 2, 1)) @ Wt + bt, (0, 2, 1))    # (B, d_deep, C)
    specxx = jnp.fft.rfft(xn, axis=1)
    specxz = jnp.fft.rfft(z, axis=1)
    specx = jnp.concatenate([specxx, specxz], axis=1)                        # (B, input_dim, C)

    sr = jnp.transpose(jnp.real(specx), (0, 2, 1)).astype(jnp.float32)       # (B, C, input_dim)
    si = jnp.transpose(jnp.imag(specx), (0, 2, 1)).astype(jnp.float32)

    def clin(xr, xi, p, act=False):
        wr, wi, br, bi = p
        yr = xr @ wr - xi @ wi + br
        yi = xr @ wi + xi @ wr + bi
        if act:
            yr = jnp.maximum(yr, 0.0)
            yi = jnp.maximum(yi, 0.0)
        return yr, yi

    xr, xi = clin(sr, si, params["enc_embedding"])
    for lyr in params["layers"]:
        qr, qi = clin(xr, xi, lyr["wq"])
        kr, ki = clin(xr, xi, lyr["wk"])
        vr, vi = clin(xr, xi, lyr["wv"])

        def split(a):
            return a.reshape(B, C, H, E).transpose(0, 2, 1, 3)

        qr_, qi_, kr_, ki_, vr_, vi_ = map(split, (qr, qi, kr, ki, vr, vi))
        s = (jnp.einsum("bhqe,bhke->bhqk", qr_, kr_)
             + jnp.einsum("bhqe,bhke->bhqk", qi_, ki_)) / math.sqrt(E)
        p = jax.nn.softmax(s, axis=-1)
        orr = jnp.einsum("bhqk,bhke->bhqe", p, vr_)
        oii = jnp.einsum("bhqk,bhke->bhqe", p, vi_)

        def merge(a):
            return a.transpose(0, 2, 1, 3).reshape(B, C, D)

        ar, ai = clin(merge(orr), merge(oii), lyr["wo"])
        xr = xr + ar
        xi = xi + ai
        yr, yi = clin(xr, xi, lyr["ffn1"], act=True)
        yr, yi = clin(yr, yi, lyr["ffn2"])
        xr = xr + yr
        xi = xi + yi

    fr, fi = clin(xr, xi, params["freq_proj"])
    freq = jnp.transpose(fr + 1j * fi, (0, 2, 1))                            # (B, out_freq, C)
    low = jnp.fft.irfft(freq, axis=1) * ((cfg.seq_len + cfg.pred_len) / cfg.seq_len)
    return low * jnp.sqrt(x_var) + x_mean


# ----------------------------------- main -------------------------------------
if __name__ == "__main__":
    # TODO(synk): individual=True, use_modrelu, use_layernorm branches of the
    # original module are not implemented (flags are off in this config).
    cfg = Cfg()
    key = jax.random.PRNGKey(0)
    k_x, k_p = jax.random.split(key)

    params = init_params(cfg, k_p)
    packed = pack_params(params, cfg)

    fwd = jax.jit(lambda xx, pp: comfreformer_forward(xx, pp, cfg))
    ref = jax.jit(lambda xx, pp: reference_forward(xx, pp, cfg))

    # --- case 1: B=2 (one sample per grid step, 2 parallel steps) ---
    B = 2
    x = jax.random.normal(k_x, (B, cfg.seq_len, cfg.enc_in), jnp.float32)
    y = fwd(x, packed)
    jax.block_until_ready(y)
    expected = (B, cfg.seq_len + cfg.pred_len, cfg.enc_in)
    assert y.shape == expected, (y.shape, expected)
    assert bool(jnp.all(jnp.isfinite(y)))
    err = float(jnp.max(jnp.abs(y - ref(x, params))))
    assert err < 2e-3, f"max abs error vs reference (B=2): {err}"

    # --- case 2: B=8 (multi-sample blocks -> block-diagonal attention path) ---
    B2 = 8
    x2 = jax.random.normal(jax.random.PRNGKey(1), (B2, cfg.seq_len, cfg.enc_in), jnp.float32)
    y2 = fwd(x2, packed)
    jax.block_until_ready(y2)
    assert y2.shape == (B2, cfg.seq_len + cfg.pred_len, cfg.enc_in)
    err2 = float(jnp.max(jnp.abs(y2 - ref(x2, params))))
    assert err2 < 2e-3, f"max abs error vs reference (B=8): {err2}"

    print("KERNEL_OK")
</pallas_src>

<mosaic_0001>
module attributes {stable_mosaic.version = 11 : i64} {
  func.func @_fused_kernel(%arg0: i32, %arg1: memref<8x16xf32, #tpu.memory_space<vmem>>, %arg2: memref<16x28xf32, #tpu.memory_space<vmem>>, %arg3: memref<1x28xf32, #tpu.memory_space<vmem>>, %arg4: memref<28x64xf32, #tpu.memory_space<vmem>>, %arg5: memref<1x64xf32, #tpu.memory_space<vmem>>, %arg6: memref<2x64x192xf32, #tpu.memory_space<vmem>>, %arg7: memref<2x1x192xf32, #tpu.memory_space<vmem>>, %arg8: memref<2x64x64xf32, #tpu.memory_space<vmem>>, %arg9: memref<2x1x64xf32, #tpu.memory_space<vmem>>, %arg10: memref<2x64x128xf32, #tpu.memory_space<vmem>>, %arg11: memref<2x1x128xf32, #tpu.memory_space<vmem>>, %arg12: memref<2x128x64xf32, #tpu.memory_space<vmem>>, %arg13: memref<2x1x64xf32, #tpu.memory_space<vmem>>, %arg14: memref<64x24xf32, #tpu.memory_space<vmem>>, %arg15: memref<1x24xf32, #tpu.memory_space<vmem>>, %arg16: memref<8x24xf32, #tpu.memory_space<vmem>>) attributes {dimension_semantics = [#tpu.dimension_semantics<parallel>], iteration_bounds = array<i64: 2>, scalar_prefetch = 0 : i64, scratch_operands = 0 : i64, tpu.core_type = #tpu.core_type<tc>, window_params = [{transform_indices = @transform_0, window_bounds = array<i64: 8, 16>}, {pipeline_mode = #tpu.pipeline_mode<synchronous>, transform_indices = @transform_1, window_bounds = array<i64: 16, 28>}, {pipeline_mode = #tpu.pipeline_mode<synchronous>, transform_indices = @transform_2, window_bounds = array<i64: 1, 28>}, {pipeline_mode = #tpu.pipeline_mode<synchronous>, transform_indices = @transform_3, window_bounds = array<i64: 28, 64>}, {pipeline_mode = #tpu.pipeline_mode<synchronous>, transform_indices = @transform_4, window_bounds = array<i64: 1, 64>}, {pipeline_mode = #tpu.pipeline_mode<synchronous>, transform_indices = @transform_5, window_bounds = array<i64: 2, 64, 192>}, {pipeline_mode = #tpu.pipeline_mode<synchronous>, transform_indices = @transform_6, window_bounds = array<i64: 2, 1, 192>}, {pipeline_mode = #tpu.pipeline_mode<synchronous>, transform_indices = @transform_7, window_bounds = array<i64: 2, 64, 64>}, {pipeline_mode = #tpu.pipeline_mode<synchronous>, transform_indices = @transform_8, window_bounds = array<i64: 2, 1, 64>}, {pipeline_mode = #tpu.pipeline_mode<synchronous>, transform_indices = @transform_9, window_bounds = array<i64: 2, 64, 128>}, {pipeline_mode = #tpu.pipeline_mode<synchronous>, transform_indices = @transform_10, window_bounds = array<i64: 2, 1, 128>}, {pipeline_mode = #tpu.pipeline_mode<synchronous>, transform_indices = @transform_11, window_bounds = array<i64: 2, 128, 64>}, {pipeline_mode = #tpu.pipeline_mode<synchronous>, transform_indices = @transform_12, window_bounds = array<i64: 2, 1, 64>}, {pipeline_mode = #tpu.pipeline_mode<synchronous>, transform_indices = @transform_13, window_bounds = array<i64: 64, 24>}, {pipeline_mode = #tpu.pipeline_mode<synchronous>, transform_indices = @transform_14, window_bounds = array<i64: 1, 24>}, {transform_indices = @transform_15, window_bounds = array<i64: 8, 24>}]} {
    %c0 = arith.constant 0 : index
    %c0_0 = arith.constant 0 : index
    %0 = vector.load %arg1[%c0, %c0_0] : memref<8x16xf32, #tpu.memory_space<vmem>>, vector<8x16xf32>
    %cst = arith.constant dense<0.000000e+00> : vector<8xf32>
    %1 = vector.multi_reduction <add>, %0, %cst [1] : vector<8x16xf32> to vector<8xf32>
    %2 = vector.shape_cast %1 : vector<8xf32> to vector<8x1xf32>
    %cst_1 = arith.constant 1.600000e+01 : f32
    %3 = vector.broadcast %cst_1 : f32 to vector<8x1xf32>
    %4 = arith.divf %2, %3 : vector<8x1xf32>
    %5 = vector.broadcast %4 : vector<8x1xf32> to vector<8x16xf32>
    %6 = arith.subf %0, %5 : vector<8x16xf32>
    %7 = arith.mulf %6, %6 : vector<8x16xf32>
    %cst_2 = arith.constant dense<0.000000e+00> : vector<8xf32>
    %8 = vector.multi_reduction <add>, %7, %cst_2 [1] : vector<8x16xf32> to vector<8xf32>
    %9 = vector.shape_cast %8 : vector<8xf32> to vector<8x1xf32>
    %cst_3 = arith.constant 0.0666666701 : f32
    %10 = vector.broadcast %cst_3 : f32 to vector<8x1xf32>
    %11 = arith.mulf %9, %10 : vector<8x1xf32>
    %cst_4 = arith.constant 9.99999974E-6 : f32
    %12 = vector.broadcast %cst_4 : f32 to vector<8x1xf32>
    %13 = arith.addf %11, %12 : vector<8x1xf32>
    %14 = math.rsqrt %13 : vector<8x1xf32>
    %15 = arith.mulf %13, %14 : vector<8x1xf32>
    %16 = vector.broadcast %14 : vector<8x1xf32> to vector<8x16xf32>
    %17 = arith.mulf %6, %16 : vector<8x16xf32>
    %c0_5 = arith.constant 0 : index
    %c0_6 = arith.constant 0 : index
    %18 = vector.load %arg2[%c0_5, %c0_6] : memref<16x28xf32, #tpu.memory_space<vmem>>, vector<16x28xf32>
    %cst_7 = arith.constant dense<0.000000e+00> : vector<8x28xf32>
    %19 = tpu.matmul %17, %18, %cst_7 {dimension_numbers = #tpu.dot_dimension_numbers<[1], [0], [0], [1], [0, 0, 1, 1], [], []>} : vector<8x16xf32>, vector<16x28xf32>, vector<8x28xf32> -> vector<8x28xf32>
    %c0_8 = arith.constant 0 : index
    %c0_9 = arith.constant 0 : index
    %20 = vector.load %arg3[%c0_8, %c0_9] : memref<1x28xf32, #tpu.memory_space<vmem>>, vector<1x28xf32>
    %21 = vector.broadcast %20 : vector<1x28xf32> to vector<8x28xf32>
    %22 = arith.addf %19, %21 : vector<8x28xf32>
    %c0_10 = arith.constant 0 : index
    %c0_11 = arith.constant 0 : index
    %23 = vector.load %arg4[%c0_10, %c0_11] : memref<28x64xf32, #tpu.memory_space<vmem>>, vector<28x64xf32>
    %cst_12 = arith.constant dense<0.000000e+00> : vector<8x64xf32>
    %24 = tpu.matmul %22, %23, %cst_12 {dimension_numbers = #tpu.dot_dimension_numbers<[1], [0], [0], [1], [0, 0, 1, 1], [], []>} : vector<8x28xf32>, vector<28x64xf32>, vector<8x64xf32> -> vector<8x64xf32>
    %c0_13 = arith.constant 0 : index
    %c0_14 = arith.constant 0 : index
    %25 = vector.load %arg5[%c0_13, %c0_14] : memref<1x64xf32, #tpu.memory_space<vmem>>, vector<1x64xf32>
    %26 = vector.broadcast %25 : vector<1x64xf32> to vector<8x64xf32>
    %27 = arith.addf %24, %26 : vector<8x64xf32>
    %c0_15 = arith.constant 0 : index
    %c0_16 = arith.constant 0 : index
    %c0_17 = arith.constant 0 : index
    %28 = vector.load %arg6[%c0_15, %c0_16, %c0_17] : memref<2x64x192xf32, #tpu.memory_space<vmem>>, vector<1x64x192xf32>
    %29 = vector.shape_cast %28 : vector<1x64x192xf32> to vector<64x192xf32>
    %cst_18 = arith.constant dense<0.000000e+00> : vector<8x192xf32>
    %30 = tpu.matmul %27, %29, %cst_18 {dimension_numbers = #tpu.dot_dimension_numbers<[1], [0], [0], [1], [0, 0, 1, 1], [], []>} : vector<8x64xf32>, vector<64x192xf32>, vector<8x192xf32> -> vector<8x192xf32>
    %c0_19 = arith.constant 0 : index
    %c0_20 = arith.constant 0 : index
    %c0_21 = arith.constant 0 : index
    %31 = vector.load %arg7[%c0_19, %c0_20, %c0_21] : memref<2x1x192xf32, #tpu.memory_space<vmem>>, vector<1x1x192xf32>
    %32 = vector.shape_cast %31 : vector<1x1x192xf32> to vector<1x192xf32>
    %33 = vector.broadcast %32 : vector<1x192xf32> to vector<8x192xf32>
    %34 = arith.addf %30, %33 : vector<8x192xf32>
    %35 = vector.extract_strided_slice %34 {offsets = [0, 0], sizes = [8, 32], strides = [1, 1]} : vector<8x192xf32> to vector<8x32xf32>
    %36 = vector.extract_strided_slice %34 {offsets = [0, 64], sizes = [8, 32], strides = [1, 1]} : vector<8x192xf32> to vector<8x32xf32>
    %37 = vector.extract_strided_slice %34 {offsets = [0, 128], sizes = [8, 32], strides = [1, 1]} : vector<8x192xf32> to vector<8x32xf32>
    %cst_22 = arith.constant dense<0.000000e+00> : vector<8x8xf32>
    %38 = tpu.matmul %35, %36, %cst_22 {dimension_numbers = #tpu.dot_dimension_numbers<[1], [1], [0], [0], [0, 0, 1, 0], [], []>} : vector<8x32xf32>, vector<8x32xf32>, vector<8x8xf32> -> vector<8x8xf32>
    %cst_23 = arith.constant dense<0xFF800000> : vector<8xf32>
    %39 = vector.multi_reduction <maximumf>, %38, %cst_23 [1] : vector<8x8xf32> to vector<8xf32>
    %40 = vector.shape_cast %39 : vector<8xf32> to vector<8x1xf32>
    %41 = vector.broadcast %40 : vector<8x1xf32> to vector<8x8xf32>
    %42 = arith.subf %38, %41 : vector<8x8xf32>
    %43 = math.exp %42 : vector<8x8xf32>
    %cst_24 = arith.constant dense<0.000000e+00> : vector<8xf32>
    %44 = vector.multi_reduction <add>, %43, %cst_24 [1] : vector<8x8xf32> to vector<8xf32>
    %45 = vector.shape_cast %44 : vector<8xf32> to vector<8x1xf32>
    %46 = vector.broadcast %45 : vector<8x1xf32> to vector<8x8xf32>
    %47 = arith.divf %43, %46 : vector<8x8xf32>
    %cst_25 = arith.constant dense<0.000000e+00> : vector<8x32xf32>
    %48 = tpu.matmul %47, %37, %cst_25 {dimension_numbers = #tpu.dot_dimension_numbers<[1], [0], [0], [1], [0, 0, 1, 1], [], []>} : vector<8x8xf32>, vector<8x32xf32>, vector<8x32xf32> -> vector<8x32xf32>
    %49 = vector.extract_strided_slice %34 {offsets = [0, 32], sizes = [8, 32], strides = [1, 1]} : vector<8x192xf32> to vector<8x32xf32>
    %50 = vector.extract_strided_slice %34 {offsets = [0, 96], sizes = [8, 32], strides = [1, 1]} : vector<8x192xf32> to vector<8x32xf32>
    %51 = vector.extract_strided_slice %34 {offsets = [0, 160], sizes = [8, 32], strides = [1, 1]} : vector<8x192xf32> to vector<8x32xf32>
    %cst_26 = arith.constant dense<0.000000e+00> : vector<8x8xf32>
    %52 = tpu.matmul %49, %50, %cst_26 {dimension_numbers = #tpu.dot_dimension_numbers<[1], [1], [0], [0], [0, 0, 1, 0], [], []>} : vector<8x32xf32>, vector<8x32xf32>, vector<8x8xf32> -> vector<8x8xf32>
    %cst_27 = arith.constant dense<0xFF800000> : vector<8xf32>
    %53 = vector.multi_reduction <maximumf>, %52, %cst_27 [1] : vector<8x8xf32> to vector<8xf32>
    %54 = vector.shape_cast %53 : vector<8xf32> to vector<8x1xf32>
    %55 = vector.broadcast %54 : vector<8x1xf32> to vector<8x8xf32>
    %56 = arith.subf %52, %55 : vector<8x8xf32>
    %57 = math.exp %56 : vector<8x8xf32>
    %cst_28 = arith.constant dense<0.000000e+00> : vector<8xf32>
    %58 = vector.multi_reduction <add>, %57, %cst_28 [1] : vector<8x8xf32> to vector<8xf32>
    %59 = vector.shape_cast %58 : vector<8xf32> to vector<8x1xf32>
    %60 = vector.broadcast %59 : vector<8x1xf32> to vector<8x8xf32>
    %61 = arith.divf %57, %60 : vector<8x8xf32>
    %cst_29 = arith.constant dense<0.000000e+00> : vector<8x32xf32>
    %62 = tpu.matmul %61, %51, %cst_29 {dimension_numbers = #tpu.dot_dimension_numbers<[1], [0], [0], [1], [0, 0, 1, 1], [], []>} : vector<8x8xf32>, vector<8x32xf32>, vector<8x32xf32> -> vector<8x32xf32>
    %63 = tpu.concatenate %48, %62 in 1 : vector<8x32xf32>, vector<8x32xf32> -> vector<8x64xf32>
    %c0_30 = arith.constant 0 : index
    %c0_31 = arith.constant 0 : index
    %c0_32 = arith.constant 0 : index
    %64 = vector.load %arg8[%c0_30, %c0_31, %c0_32] : memref<2x64x64xf32, #tpu.memory_space<vmem>>, vector<1x64x64xf32>
    %65 = vector.shape_cast %64 : vector<1x64x64xf32> to vector<64x64xf32>
    %cst_33 = arith.constant dense<0.000000e+00> : vector<8x64xf32>
    %66 = tpu.matmul %63, %65, %cst_33 {dimension_numbers = #tpu.dot_dimension_numbers<[1], [0], [0], [1], [0, 0, 1, 1], [], []>} : vector<8x64xf32>, vector<64x64xf32>, vector<8x64xf32> -> vector<8x64xf32>
    %c0_34 = arith.constant 0 : index
    %c0_35 = arith.constant 0 : index
    %c0_36 = arith.constant 0 : index
    %67 = vector.load %arg9[%c0_34, %c0_35, %c0_36] : memref<2x1x64xf32, #tpu.memory_space<vmem>>, vector<1x1x64xf32>
    %68 = vector.shape_cast %67 : vector<1x1x64xf32> to vector<1x64xf32>
    %69 = vector.broadcast %68 : vector<1x64xf32> to vector<8x64xf32>
    %70 = arith.addf %66, %69 : vector<8x64xf32>
    %71 = arith.addf %27, %70 : vector<8x64xf32>
    %c0_37 = arith.constant 0 : index
    %c0_38 = arith.constant 0 : index
    %c0_39 = arith.constant 0 : index
    %72 = vector.load %arg10[%c0_37, %c0_38, %c0_39] : memref<2x64x128xf32, #tpu.memory_space<vmem>>, vector<1x64x128xf32>
    %73 = vector.shape_cast %72 : vector<1x64x128xf32> to vector<64x128xf32>
    %cst_40 = arith.constant dense<0.000000e+00> : vector<8x128xf32>
    %74 = tpu.matmul %71, %73, %cst_40 {dimension_numbers = #tpu.dot_dimension_numbers<[1], [0], [0], [1], [0, 0, 1, 1], [], []>} : vector<8x64xf32>, vector<64x128xf32>, vector<8x128xf32> -> vector<8x128xf32>
    %c0_41 = arith.constant 0 : index
    %c0_42 = arith.constant 0 : index
    %c0_43 = arith.constant 0 : index
    %75 = vector.load %arg11[%c0_41, %c0_42, %c0_43] : memref<2x1x128xf32, #tpu.memory_space<vmem>>, vector<1x1x128xf32>
    %76 = vector.shape_cast %75 : vector<1x1x128xf32> to vector<1x128xf32>
    %77 = vector.broadcast %76 : vector<1x128xf32> to vector<8x128xf32>
    %78 = arith.addf %74, %77 : vector<8x128xf32>
    %cst_44 = arith.constant 0.000000e+00 : f32
    %79 = vector.broadcast %cst_44 : f32 to vector<8x128xf32>
    %80 = arith.maximumf %78, %79 : vector<8x128xf32>
    %c0_45 = arith.constant 0 : index
    %c0_46 = arith.constant 0 : index
    %c0_47 = arith.constant 0 : index
    %81 = vector.load %arg12[%c0_45, %c0_46, %c0_47] : memref<2x128x64xf32, #tpu.memory_space<vmem>>, vector<1x128x64xf32>
    %82 = vector.shape_cast %81 : vector<1x128x64xf32> to vector<128x64xf32>
    %cst_48 = arith.constant dense<0.000000e+00> : vector<8x64xf32>
    %83 = tpu.matmul %80, %82, %cst_48 {dimension_numbers = #tpu.dot_dimension_numbers<[1], [0], [0], [1], [0, 0, 1, 1], [], []>} : vector<8x128xf32>, vector<128x64xf32>, vector<8x64xf32> -> vector<8x64xf32>
    %c0_49 = arith.constant 0 : index
    %c0_50 = arith.constant 0 : index
    %c0_51 = arith.constant 0 : index
    %84 = vector.load %arg13[%c0_49, %c0_50, %c0_51] : memref<2x1x64xf32, #tpu.memory_space<vmem>>, vector<1x1x64xf32>
    %85 = vector.shape_cast %84 : vector<1x1x64xf32> to vector<1x64xf32>
    %86 = vector.broadcast %85 : vector<1x64xf32> to vector<8x64xf32>
    %87 = arith.addf %83, %86 : vector<8x64xf32>
    %88 = arith.addf %71, %87 : vector<8x64xf32>
    %c1 = arith.constant 1 : index
    %c0_52 = arith.constant 0 : index
    %c0_53 = arith.constant 0 : index
    %89 = vector.load %arg6[%c1, %c0_52, %c0_53] : memref<2x64x192xf32, #tpu.memory_space<vmem>>, vector<1x64x192xf32>
    %90 = vector.shape_cast %89 : vector<1x64x192xf32> to vector<64x192xf32>
    %cst_54 = arith.constant dense<0.000000e+00> : vector<8x192xf32>
    %91 = tpu.matmul %88, %90, %cst_54 {dimension_numbers = #tpu.dot_dimension_numbers<[1], [0], [0], [1], [0, 0, 1, 1], [], []>} : vector<8x64xf32>, vector<64x192xf32>, vector<8x192xf32> -> vector<8x192xf32>
    %c1_55 = arith.constant 1 : index
    %c0_56 = arith.constant 0 : index
    %c0_57 = arith.constant 0 : index
    %92 = vector.load %arg7[%c1_55, %c0_56, %c0_57] : memref<2x1x192xf32, #tpu.memory_space<vmem>>, vector<1x1x192xf32>
    %93 = vector.shape_cast %92 : vector<1x1x192xf32> to vector<1x192xf32>
    %94 = vector.broadcast %93 : vector<1x192xf32> to vector<8x192xf32>
    %95 = arith.addf %91, %94 : vector<8x192xf32>
    %96 = vector.extract_strided_slice %95 {offsets = [0, 0], sizes = [8, 32], strides = [1, 1]} : vector<8x192xf32> to vector<8x32xf32>
    %97 = vector.extract_strided_slice %95 {offsets = [0, 64], sizes = [8, 32], strides = [1, 1]} : vector<8x192xf32> to vector<8x32xf32>
    %98 = vector.extract_strided_slice %95 {offsets = [0, 128], sizes = [8, 32], strides = [1, 1]} : vector<8x192xf32> to vector<8x32xf32>
    %cst_58 = arith.constant dense<0.000000e+00> : vector<8x8xf32>
    %99 = tpu.matmul %96, %97, %cst_58 {dimension_numbers = #tpu.dot_dimension_numbers<[1], [1], [0], [0], [0, 0, 1, 0], [], []>} : vector<8x32xf32>, vector<8x32xf32>, vector<8x8xf32> -> vector<8x8xf32>
    %cst_59 = arith.constant dense<0xFF800000> : vector<8xf32>
    %100 = vector.multi_reduction <maximumf>, %99, %cst_59 [1] : vector<8x8xf32> to vector<8xf32>
    %101 = vector.shape_cast %100 : vector<8xf32> to vector<8x1xf32>
    %102 = vector.broadcast %101 : vector<8x1xf32> to vector<8x8xf32>
    %103 = arith.subf %99, %102 : vector<8x8xf32>
    %104 = math.exp %103 : vector<8x8xf32>
    %cst_60 = arith.constant dense<0.000000e+00> : vector<8xf32>
    %105 = vector.multi_reduction <add>, %104, %cst_60 [1] : vector<8x8xf32> to vector<8xf32>
    %106 = vector.shape_cast %105 : vector<8xf32> to vector<8x1xf32>
    %107 = vector.broadcast %106 : vector<8x1xf32> to vector<8x8xf32>
    %108 = arith.divf %104, %107 : vector<8x8xf32>
    %cst_61 = arith.constant dense<0.000000e+00> : vector<8x32xf32>
    %109 = tpu.matmul %108, %98, %cst_61 {dimension_numbers = #tpu.dot_dimension_numbers<[1], [0], [0], [1], [0, 0, 1, 1], [], []>} : vector<8x8xf32>, vector<8x32xf32>, vector<8x32xf32> -> vector<8x32xf32>
    %110 = vector.extract_strided_slice %95 {offsets = [0, 32], sizes = [8, 32], strides = [1, 1]} : vector<8x192xf32> to vector<8x32xf32>
    %111 = vector.extract_strided_slice %95 {offsets = [0, 96], sizes = [8, 32], strides = [1, 1]} : vector<8x192xf32> to vector<8x32xf32>
    %112 = vector.extract_strided_slice %95 {offsets = [0, 160], sizes = [8, 32], strides = [1, 1]} : vector<8x192xf32> to vector<8x32xf32>
    %cst_62 = arith.constant dense<0.000000e+00> : vector<8x8xf32>
    %113 = tpu.matmul %110, %111, %cst_62 {dimension_numbers = #tpu.dot_dimension_numbers<[1], [1], [0], [0], [0, 0, 1, 0], [], []>} : vector<8x32xf32>, vector<8x32xf32>, vector<8x8xf32> -> vector<8x8xf32>
    %cst_63 = arith.constant dense<0xFF800000> : vector<8xf32>
    %114 = vector.multi_reduction <maximumf>, %113, %cst_63 [1] : vector<8x8xf32> to vector<8xf32>
    %115 = vector.shape_cast %114 : vector<8xf32> to vector<8x1xf32>
    %116 = vector.broadcast %115 : vector<8x1xf32> to vector<8x8xf32>
    %117 = arith.subf %113, %116 : vector<8x8xf32>
    %118 = math.exp %117 : vector<8x8xf32>
    %cst_64 = arith.constant dense<0.000000e+00> : vector<8xf32>
    %119 = vector.multi_reduction <add>, %118, %cst_64 [1] : vector<8x8xf32> to vector<8xf32>
    %120 = vector.shape_cast %119 : vector<8xf32> to vector<8x1xf32>
    %121 = vector.broadcast %120 : vector<8x1xf32> to vector<8x8xf32>
    %122 = arith.divf %118, %121 : vector<8x8xf32>
    %cst_65 = arith.constant dense<0.000000e+00> : vector<8x32xf32>
    %123 = tpu.matmul %122, %112, %cst_65 {dimension_numbers = #tpu.dot_dimension_numbers<[1], [0], [0], [1], [0, 0, 1, 1], [], []>} : vector<8x8xf32>, vector<8x32xf32>, vector<8x32xf32> -> vector<8x32xf32>
    %124 = tpu.concatenate %109, %123 in 1 : vector<8x32xf32>, vector<8x32xf32> -> vector<8x64xf32>
    %c1_66 = arith.constant 1 : index
    %c0_67 = arith.constant 0 : index
    %c0_68 = arith.constant 0 : index
    %125 = vector.load %arg8[%c1_66, %c0_67, %c0_68] : memref<2x64x64xf32, #tpu.memory_space<vmem>>, vector<1x64x64xf32>
    %126 = vector.shape_cast %125 : vector<1x64x64xf32> to vector<64x64xf32>
    %cst_69 = arith.constant dense<0.000000e+00> : vector<8x64xf32>
    %127 = tpu.matmul %124, %126, %cst_69 {dimension_numbers = #tpu.dot_dimension_numbers<[1], [0], [0], [1], [0, 0, 1, 1], [], []>} : vector<8x64xf32>, vector<64x64xf32>, vector<8x64xf32> -> vector<8x64xf32>
    %c1_70 = arith.constant 1 : index
    %c0_71 = arith.constant 0 : index
    %c0_72 = arith.constant 0 : index
    %128 = vector.load %arg9[%c1_70, %c0_71, %c0_72] : memref<2x1x64xf32, #tpu.memory_space<vmem>>, vector<1x1x64xf32>
    %129 = vector.shape_cast %128 : vector<1x1x64xf32> to vector<1x64xf32>
    %130 = vector.broadcast %129 : vector<1x64xf32> to vector<8x64xf32>
    %131 = arith.addf %127, %130 : vector<8x64xf32>
    %132 = arith.addf %88, %131 : vector<8x64xf32>
    %c1_73 = arith.constant 1 : index
    %c0_74 = arith.constant 0 : index
    %c0_75 = arith.constant 0 : index
    %133 = vector.load %arg10[%c1_73, %c0_74, %c0_75] : memref<2x64x128xf32, #tpu.memory_space<vmem>>, vector<1x64x128xf32>
    %134 = vector.shape_cast %133 : vector<1x64x128xf32> to vector<64x128xf32>
    %cst_76 = arith.constant dense<0.000000e+00> : vector<8x128xf32>
    %135 = tpu.matmul %132, %134, %cst_76 {dimension_numbers = #tpu.dot_dimension_numbers<[1], [0], [0], [1], [0, 0, 1, 1], [], []>} : vector<8x64xf32>, vector<64x128xf32>, vector<8x128xf32> -> vector<8x128xf32>
    %c1_77 = arith.constant 1 : index
    %c0_78 = arith.constant 0 : index
    %c0_79 = arith.constant 0 : index
    %136 = vector.load %arg11[%c1_77, %c0_78, %c0_79] : memref<2x1x128xf32, #tpu.memory_space<vmem>>, vector<1x1x128xf32>
    %137 = vector.shape_cast %136 : vector<1x1x128xf32> to vector<1x128xf32>
    %138 = vector.broadcast %137 : vector<1x128xf32> to vector<8x128xf32>
    %139 = arith.addf %135, %138 : vector<8x128xf32>
    %cst_80 = arith.constant 0.000000e+00 : f32
    %140 = vector.broadcast %cst_80 : f32 to vector<8x128xf32>
    %141 = arith.maximumf %139, %140 : vector<8x128xf32>
    %c1_81 = arith.constant 1 : index
    %c0_82 = arith.constant 0 : index
    %c0_83 = arith.constant 0 : index
    %142 = vector.load %arg12[%c1_81, %c0_82, %c0_83] : memref<2x128x64xf32, #tpu.memory_space<vmem>>, vector<1x128x64xf32>
    %143 = vector.shape_cast %142 : vector<1x128x64xf32> to vector<128x64xf32>
    %cst_84 = arith.constant dense<0.000000e+00> : vector<8x64xf32>
    %144 = tpu.matmul %141, %143, %cst_84 {dimension_numbers = #tpu.dot_dimension_numbers<[1], [0], [0], [1], [0, 0, 1, 1], [], []>} : vector<8x128xf32>, vector<128x64xf32>, vector<8x64xf32> -> vector<8x64xf32>
    %c1_85 = arith.constant 1 : index
    %c0_86 = arith.constant 0 : index
    %c0_87 = arith.constant 0 : index
    %145 = vector.load %arg13[%c1_85, %c0_86, %c0_87] : memref<2x1x64xf32, #tpu.memory_space<vmem>>, vector<1x1x64xf32>
    %146 = vector.shape_cast %145 : vector<1x1x64xf32> to vector<1x64xf32>
    %147 = vector.broadcast %146 : vector<1x64xf32> to vector<8x64xf32>
    %148 = arith.addf %144, %147 : vector<8x64xf32>
    %149 = arith.addf %132, %148 : vector<8x64xf32>
    %c0_88 = arith.constant 0 : index
    %c0_89 = arith.constant 0 : index
    %150 = vector.load %arg14[%c0_88, %c0_89] : memref<64x24xf32, #tpu.memory_space<vmem>>, vector<64x24xf32>
    %cst_90 = arith.constant dense<0.000000e+00> : vector<8x24xf32>
    %151 = tpu.matmul %149, %150, %cst_90 {dimension_numbers = #tpu.dot_dimension_numbers<[1], [0], [0], [1], [0, 0, 1, 1], [], []>} : vector<8x64xf32>, vector<64x24xf32>, vector<8x24xf32> -> vector<8x24xf32>
    %c0_91 = arith.constant 0 : index
    %c0_92 = arith.constant 0 : index
    %152 = vector.load %arg15[%c0_91, %c0_92] : memref<1x24xf32, #tpu.memory_space<vmem>>, vector<1x24xf32>
    %153 = vector.broadcast %152 : vector<1x24xf32> to vector<8x24xf32>
    %154 = arith.addf %151, %153 : vector<8x24xf32>
    %155 = vector.broadcast %15 : vector<8x1xf32> to vector<8x24xf32>
    %156 = arith.mulf %154, %155 : vector<8x24xf32>
    %157 = vector.broadcast %4 : vector<8x1xf32> to vector<8x24xf32>
    %158 = arith.addf %156, %157 : vector<8x24xf32>
    %c0_93 = arith.constant 0 : index
    %c0_94 = arith.constant 0 : index
    %159 = vector.load %arg16[%c0_93, %c0_94] : memref<8x24xf32, #tpu.memory_space<vmem>>, vector<8x24xf32>
    tpu.vector_store %arg16[%c0_93, %c0_94], %158 {strides = array<i32>} : memref<8x24xf32, #tpu.memory_space<vmem>>, vector<8x24xf32>,
    return
  }
  func.func @transform_0(%arg0: i32) -> (i32, i32) {
    %c0_i32 = arith.constant 0 : i32
    %c0_i32_0 = arith.constant 0 : i32
    return %arg0, %c0_i32 : i32, i32
  }
  func.func @transform_1(%arg0: i32) -> (i32, i32) {
    %c0_i32 = arith.constant 0 : i32
    %c0_i32_0 = arith.constant 0 : i32
    %c0_i32_1 = arith.constant 0 : i32
    return %c0_i32, %c0_i32_0 : i32, i32
  }
  func.func @transform_2(%arg0: i32) -> (i32, i32) {
    %c0_i32 = arith.constant 0 : i32
    %c0_i32_0 = arith.constant 0 : i32
    %c0_i32_1 = arith.constant 0 : i32
    return %c0_i32, %c0_i32_0 : i32, i32
  }
  func.func @transform_3(%arg0: i32) -> (i32, i32) {
    %c0_i32 = arith.constant 0 : i32
    %c0_i32_0 = arith.constant 0 : i32
    %c0_i32_1 = arith.constant 0 : i32
    return %c0_i32, %c0_i32_0 : i32, i32
  }
  func.func @transform_4(%arg0: i32) -> (i32, i32) {
    %c0_i32 = arith.constant 0 : i32
    %c0_i32_0 = arith.constant 0 : i32
    %c0_i32_1 = arith.constant 0 : i32
    return %c0_i32, %c0_i32_0 : i32, i32
  }
  func.func @transform_5(%arg0: i32) -> (i32, i32, i32) {
    %c0_i32 = arith.constant 0 : i32
    %c0_i32_0 = arith.constant 0 : i32
    %c0_i32_1 = arith.constant 0 : i32
    %c0_i32_2 = arith.constant 0 : i32
    return %c0_i32, %c0_i32_0, %c0_i32_1 : i32, i32, i32
  }
  func.func @transform_6(%arg0: i32) -> (i32, i32, i32) {
    %c0_i32 = arith.constant 0 : i32
    %c0_i32_0 = arith.constant 0 : i32
    %c0_i32_1 = arith.constant 0 : i32
    %c0_i32_2 = arith.constant 0 : i32
    return %c0_i32, %c0_i32_0, %c0_i32_1 : i32, i32, i32
  }
  func.func @transform_7(%arg0: i32) -> (i32, i32, i32) {
    %c0_i32 = arith.constant 0 : i32
    %c0_i32_0 = arith.constant 0 : i32
    %c0_i32_1 = arith.constant 0 : i32
    %c0_i32_2 = arith.constant 0 : i32
    return %c0_i32, %c0_i32_0, %c0_i32_1 : i32, i32, i32
  }
  func.func @transform_8(%arg0: i32) -> (i32, i32, i32) {
    %c0_i32 = arith.constant 0 : i32
    %c0_i32_0 = arith.constant 0 : i32
    %c0_i32_1 = arith.constant 0 : i32
    %c0_i32_2 = arith.constant 0 : i32
    return %c0_i32, %c0_i32_0, %c0_i32_1 : i32, i32, i32
  }
  func.func @transform_9(%arg0: i32) -> (i32, i32, i32) {
    %c0_i32 = arith.constant 0 : i32
    %c0_i32_0 = arith.constant 0 : i32
    %c0_i32_1 = arith.constant 0 : i32
    %c0_i32_2 = arith.constant 0 : i32
    return %c0_i32, %c0_i32_0, %c0_i32_1 : i32, i32, i32
  }
  func.func @transform_10(%arg0: i32) -> (i32, i32, i32) {
    %c0_i32 = arith.constant 0 : i32
    %c0_i32_0 = arith.constant 0 : i32
    %c0_i32_1 = arith.constant 0 : i32
    %c0_i32_2 = arith.constant 0 : i32
    return %c0_i32, %c0_i32_0, %c0_i32_1 : i32, i32, i32
  }
  func.func @transform_11(%arg0: i32) -> (i32, i32, i32) {
    %c0_i32 = arith.constant 0 : i32
    %c0_i32_0 = arith.constant 0 : i32
    %c0_i32_1 = arith.constant 0 : i32
    %c0_i32_2 = arith.constant 0 : i32
    return %c0_i32, %c0_i32_0, %c0_i32_1 : i32, i32, i32
  }
  func.func @transform_12(%arg0: i32) -> (i32, i32, i32) {
    %c0_i32 = arith.constant 0 : i32
    %c0_i32_0 = arith.constant 0 : i32
    %c0_i32_1 = arith.constant 0 : i32
    %c0_i32_2 = arith.constant 0 : i32
    return %c0_i32, %c0_i32_0, %c0_i32_1 : i32, i32, i32
  }
  func.func @transform_13(%arg0: i32) -> (i32, i32) {
    %c0_i32 = arith.constant 0 : i32
    %c0_i32_0 = arith.constant 0 : i32
    %c0_i32_1 = arith.constant 0 : i32
    return %c0_i32, %c0_i32_0 : i32, i32
  }
  func.func @transform_14(%arg0: i32) -> (i32, i32) {
    %c0_i32 = arith.constant 0 : i32
    %c0_i32_0 = arith.constant 0 : i32
    %c0_i32_1 = arith.constant 0 : i32
    return %c0_i32, %c0_i32_0 : i32, i32
  }
  func.func @transform_15(%arg0: i32) -> (i32, i32) {
    %c0_i32 = arith.constant 0 : i32
    %c0_i32_0 = arith.constant 0 : i32
    return %arg0, %c0_i32 : i32, i32
  }
}

</mosaic_0001>

<llo_original>
// kernel: _lambda_.1
$region0: #{_lambda_.1}
  #allocation0 [shape = 'u32[]', space=smem, size = 0x4, offset = 0x4, fixed_abs, tag = 'smem constant byte address 0x4 - core index']
  #allocation1 [shape = 'u32[144,128]{1,0:T(1,128)}', space=vmem, size = 0x12000, scoped, tag = 'internal scratch']
  %s0 = inlined_call_operand.vmem [shape: f32[16,16], index: 0, kind: input, shape index: {}]
  %s1 = inlined_call_operand.vmem [shape: f32[16,28], index: 1, kind: input, shape index: {}]
  %s2 = inlined_call_operand.vmem [shape: f32[1,28], index: 2, kind: input, shape index: {}]
  %s3 = inlined_call_operand.vmem [shape: f32[28,64], index: 3, kind: input, shape index: {}]
  %s4 = inlined_call_operand.vmem [shape: f32[1,64], index: 4, kind: input, shape index: {}]
  %s5 = inlined_call_operand.vmem [shape: f32[2,64,192], index: 5, kind: input, shape index: {}]
  %s6 = inlined_call_operand.vmem [shape: f32[2,1,192], index: 6, kind: input, shape index: {}]
  %s7 = inlined_call_operand.vmem [shape: f32[2,64,64], index: 7, kind: input, shape index: {}]
  %s8 = inlined_call_operand.vmem [shape: f32[2,1,64], index: 8, kind: input, shape index: {}]
  %s9 = inlined_call_operand.hbm [shape: f32[2,64,128], index: 9, kind: input, shape index: {}]
  %s10 = inlined_call_operand.vmem [shape: f32[2,1,128], index: 10, kind: input, shape index: {}]
  %s11 = inlined_call_operand.vmem [shape: f32[2,128,64], index: 11, kind: input, shape index: {}]
  %s12 = inlined_call_operand.vmem [shape: f32[2,1,64], index: 12, kind: input, shape index: {}]
  %s13 = inlined_call_operand.vmem [shape: f32[64,24], index: 13, kind: input, shape index: {}]
  %s14 = inlined_call_operand.vmem [shape: f32[1,24], index: 14, kind: input, shape index: {}]
  %s15 = inlined_call_operand.hbm [shape: f32[16,24], index: 15, kind: output, shape index: {}]
  %s16 = sld [smem:[#allocation0]]
  $region97: #{_lambda_.1} parent=0
    _
  %s18 = ssub.s32 1, %s16
  %s19 = scalar_select 0, %s18, %s16
  $region1: #{_lambda_.1} parent=0
    #allocation2 [shape = 'u8[65536]{0}', space=vmem, size = 0x10000, scoped, tag = 'input window, operand 9, single buffered']
    #allocation3 [shape = 's32[2]{0}', space=sflag, size = 0x8, scoped, tag = 'scoped memory for _lambda_.1']
    #allocation4 [shape = 's32[2]{0}', space=sflag, size = 0x8, scoped, tag = 'scoped memory for _lambda_.1']
    #allocation5 [shape = 'u8[8192]{0}', space=vmem, size = 0x2000, scoped, tag = 'output window, operand 0']
    %20 = vsyncpa [#allocation3], 0
    %21 = vsyncpa [#allocation4], 0
    %s22 = scalar_lea.sflag [#allocation4], 1
    %23 = vsyncpa %s22, 0
    loop: start=0, step=1, limit=4
    $region2: #{_lambda_.1} parent=1 // loop_pre_header
      _
    $region3: #{_lambda_.1} parent=1 // loop_header
      %s25 = sphi 0, %s29
      %p26 = scmp.ge.s32.totalorder %s25, 4
      %s35 = sphi 0, %s37
      %s38 = sphi 0, %s35
      %s39 = sphi 0, %s38
      %s55 = sphi 0, %s39
      %s59 = sphi 0, %s59
      %s61 = sphi 0, %s59
      %s62 = sphi 0, %s61
      %s76 = sphi 0, %s62
      %s80 = sphi 0, %s80
      %s82 = sphi 0, %s80
      %s83 = sphi 0, %s82
      %s97 = sphi 0, %s83
      %s101 = sphi 0, %s101
      %s103 = sphi 0, %s101
      %s104 = sphi 0, %s103
      %s118 = sphi 0, %s104
      %s122 = sphi 0, %s122
      %s124 = sphi 0, %s122
      %s125 = sphi 0, %s124
      %s139 = sphi 0, %s125
      %s143 = sphi 0, %s143
      %s145 = sphi 0, %s143
      %s146 = sphi 0, %s145
      %s160 = sphi 0, %s146
      %s164 = sphi 0, %s164
      %s166 = sphi 0, %s164
      %s167 = sphi 0, %s166
      %s181 = sphi 0, %s167
      %s185 = sphi 0, %s185
      %s187 = sphi 0, %s185
      %s188 = sphi 0, %s187
      %s202 = sphi 0, %s188
      %s206 = sphi 0, %s206
      %s208 = sphi 0, %s206
      %s209 = sphi 0, %s208
      %s223 = sphi 0, %s209
      %s227 = sphi 0, %s227
      %s229 = sphi 0, %s227
      %s230 = sphi 0, %s229
      %s244 = sphi 0, %s230
      %s248 = sphi 0, %s248
      %s250 = sphi 0, %s248
      %s251 = sphi 0, %s250
      %s265 = sphi 0, %s251
      %s269 = sphi 0, %s269
      %s271 = sphi 0, %s269
      %s272 = sphi 0, %s271
      %s286 = sphi 0, %s272
      %s290 = sphi 0, %s290
      %s292 = sphi 0, %s290
      %s293 = sphi 0, %s292
      %s307 = sphi 0, %s293
      %s311 = sphi 0, %s311
      %s313 = sphi 0, %s311
      %s314 = sphi 0, %s313
      %s328 = sphi 0, %s314
      %s332 = sphi 0, %s332
      %s334 = sphi 0, %s332
      %s335 = sphi 0, %s334
      %s349 = sphi 0, %s335
      %s355 = sphi 0, %s357
      %s358 = sphi 0, %s355
      %s359 = sphi 0, %s358
      %s375 = sphi 0, %s359
    $region4: #{_lambda_.1} parent=1 // loop_header_branch
      %28 = sbr.rel (%p26) target = $region8
    $region5: #{_lambda_.1} parent=1 // loop_body
      %s30 = ssub.s32 %s25, 1
      %s31 = ssub.s32 %s25, 2
      %s32 = sadd.s32 %s25, 1
      %s33 = ssub.s32 %s25, %s32
      %p34 = scmp.eq.s32.totalorder %s33, 0
      %s36 = sadd.s32 %s35, 1
      %s37 = scalar_select %p34, %s35, %s36
      %p40 = pneg %p34
      %p41 = scmp.eq.s32.totalorder %s25, 1
      %p42 = por %p40, %p41
      %p43 = scmp.ne.s32.totalorder %s35, %s38
      %p44 = scmp.eq.s32.totalorder %s25, 0
      %p45 = por %p43, %p44
      %p46 = scmp.ne.s32.totalorder %s35, %s38
      %p47 = scmp.eq.s32.totalorder %s30, 1
      %p48 = por %p46, %p47
      %p49 = scmp.ne.s32.totalorder %s38, %s39
      %p50 = scmp.eq.s32.totalorder %s30, 0
      %p51 = por %p49, %p50
      %p52 = scmp.ne.s32.totalorder %s38, %s39
      %p53 = scmp.eq.s32.totalorder %s31, 1
      %p54 = por %p52, %p53
      %p56 = scmp.ne.s32.totalorder %s39, %s55
      %p57 = scmp.eq.s32.totalorder %s31, 0
      %p58 = por %p56, %p57
      %s60 = sadd.s32 %s59, 1
      %p63 = scmp.eq.s32.totalorder %s25, 1
      %p64 = scmp.ne.s32.totalorder %s59, %s61
      %p65 = scmp.eq.s32.totalorder %s25, 0
      %p66 = por %p64, %p65
      %p67 = scmp.ne.s32.totalorder %s59, %s61
      %p68 = scmp.eq.s32.totalorder %s30, 1
      %p69 = por %p67, %p68
      %p70 = scmp.ne.s32.totalorder %s61, %s62
      %p71 = scmp.eq.s32.totalorder %s30, 0
      %p72 = por %p70, %p71
      %p73 = scmp.ne.s32.totalorder %s61, %s62
      %p74 = scmp.eq.s32.totalorder %s31, 1
      %p75 = por %p73, %p74
      %p77 = scmp.ne.s32.totalorder %s62, %s76
      %p78 = scmp.eq.s32.totalorder %s31, 0
      %p79 = por %p77, %p78
      %s81 = sadd.s32 %s80, 1
      %p84 = scmp.eq.s32.totalorder %s25, 1
      %p85 = scmp.ne.s32.totalorder %s80, %s82
      %p86 = scmp.eq.s32.totalorder %s25, 0
      %p87 = por %p85, %p86
      %p88 = scmp.ne.s32.totalorder %s80, %s82
      %p89 = scmp.eq.s32.totalorder %s30, 1
      %p90 = por %p88, %p89
      %p91 = scmp.ne.s32.totalorder %s82, %s83
      %p92 = scmp.eq.s32.totalorder %s30, 0
      %p93 = por %p91, %p92
      %p94 = scmp.ne.s32.totalorder %s82, %s83
      %p95 = scmp.eq.s32.totalorder %s31, 1
      %p96 = por %p94, %p95
      %p98 = scmp.ne.s32.totalorder %s83, %s97
      %p99 = scmp.eq.s32.totalorder %s31, 0
      %p100 = por %p98, %p99
      %s102 = sadd.s32 %s101, 1
      %p105 = scmp.eq.s32.totalorder %s25, 1
      %p106 = scmp.ne.s32.totalorder %s101, %s103
      %p107 = scmp.eq.s32.totalorder %s25, 0
      %p108 = por %p106, %p107
      %p109 = scmp.ne.s32.totalorder %s101, %s103
      %p110 = scmp.eq.s32.totalorder %s30, 1
      %p111 = por %p109, %p110
      %p112 = scmp.ne.s32.totalorder %s103, %s104
      %p113 = scmp.eq.s32.totalorder %s30, 0
      %p114 = por %p112, %p113
      %p115 = scmp.ne.s32.totalorder %s103, %s104
      %p116 = scmp.eq.s32.totalorder %s31, 1
      %p117 = por %p115, %p116
      %p119 = scmp.ne.s32.totalorder %s104, %s118
      %p120 = scmp.eq.s32.totalorder %s31, 0
      %p121 = por %p119, %p120
      %s123 = sadd.s32 %s122, 1
      %p126 = scmp.eq.s32.totalorder %s25, 1
      %p127 = scmp.ne.s32.totalorder %s122, %s124
      %p128 = scmp.eq.s32.totalorder %s25, 0
      %p129 = por %p127, %p128
      %p130 = scmp.ne.s32.totalorder %s122, %s124
      %p131 = scmp.eq.s32.totalorder %s30, 1
      %p132 = por %p130, %p131
      %p133 = scmp.ne.s32.totalorder %s124, %s125
      %p134 = scmp.eq.s32.totalorder %s30, 0
      %p135 = por %p133, %p134
      %p136 = scmp.ne.s32.totalorder %s124, %s125
      %p137 = scmp.eq.s32.totalorder %s31, 1
      %p138 = por %p136, %p137
      %p140 = scmp.ne.s32.totalorder %s125, %s139
      %p141 = scmp.eq.s32.totalorder %s31, 0
      %p142 = por %p140, %p141
      %s144 = sadd.s32 %s143, 1
      %p147 = scmp.eq.s32.totalorder %s25, 1
      %p148 = scmp.ne.s32.totalorder %s143, %s145
      %p149 = scmp.eq.s32.totalorder %s25, 0
      %p150 = por %p148, %p149
      %p151 = scmp.ne.s32.totalorder %s143, %s145
      %p152 = scmp.eq.s32.totalorder %s30, 1
      %p153 = por %p151, %p152
      %p154 = scmp.ne.s32.totalorder %s145, %s146
      %p155 = scmp.eq.s32.totalorder %s30, 0
      %p156 = por %p154, %p155
      %p157 = scmp.ne.s32.totalorder %s145, %s146
      %p158 = scmp.eq.s32.totalorder %s31, 1
      %p159 = por %p157, %p158
      %p161 = scmp.ne.s32.totalorder %s146, %s160
      %p162 = scmp.eq.s32.totalorder %s31, 0
      %p163 = por %p161, %p162
      %s165 = sadd.s32 %s164, 1
      %p168 = scmp.eq.s32.totalorder %s25, 1
      %p169 = scmp.ne.s32.totalorder %s164, %s166
      %p170 = scmp.eq.s32.totalorder %s25, 0
      %p171 = por %p169, %p170
      %p172 = scmp.ne.s32.totalorder %s164, %s166
      %p173 = scmp.eq.s32.totalorder %s30, 1
      %p174 = por %p172, %p173
      %p175 = scmp.ne.s32.totalorder %s166, %s167
      %p176 = scmp.eq.s32.totalorder %s30, 0
      %p177 = por %p175, %p176
      %p178 = scmp.ne.s32.totalorder %s166, %s167
      %p179 = scmp.eq.s32.totalorder %s31, 1
      %p180 = por %p178, %p179
      %p182 = scmp.ne.s32.totalorder %s167, %s181
      %p183 = scmp.eq.s32.totalorder %s31, 0
      %p184 = por %p182, %p183
      %s186 = sadd.s32 %s185, 1
      %p189 = scmp.eq.s32.totalorder %s25, 1
      %p190 = scmp.ne.s32.totalorder %s185, %s187
      %p191 = scmp.eq.s32.totalorder %s25, 0
      %p192 = por %p190, %p191
      %p193 = scmp.ne.s32.totalorder %s185, %s187
      %p194 = scmp.eq.s32.totalorder %s30, 1
      %p195 = por %p193, %p194
      %p196 = scmp.ne.s32.totalorder %s187, %s188
      %p197 = scmp.eq.s32.totalorder %s30, 0
      %p198 = por %p196, %p197
      %p199 = scmp.ne.s32.totalorder %s187, %s188
      %p200 = scmp.eq.s32.totalorder %s31, 1
      %p201 = por %p199, %p200
      %p203 = scmp.ne.s32.totalorder %s188, %s202
      %p204 = scmp.eq.s32.totalorder %s31, 0
      %p205 = por %p203, %p204
      %s207 = sadd.s32 %s206, 1
      %p210 = scmp.eq.s32.totalorder %s25, 1
      %p211 = scmp.ne.s32.totalorder %s206, %s208
      %p212 = scmp.eq.s32.totalorder %s25, 0
      %p213 = por %p211, %p212
      %p214 = scmp.ne.s32.totalorder %s206, %s208
      %p215 = scmp.eq.s32.totalorder %s30, 1
      %p216 = por %p214, %p215
      %p217 = scmp.ne.s32.totalorder %s208, %s209
      %p218 = scmp.eq.s32.totalorder %s30, 0
      %p219 = por %p217, %p218
      %p220 = scmp.ne.s32.totalorder %s208, %s209
      %p221 = scmp.eq.s32.totalorder %s31, 1
      %p222 = por %p220, %p221
      %p224 = scmp.ne.s32.totalorder %s209, %s223
      %p225 = scmp.eq.s32.totalorder %s31, 0
      %p226 = por %p224, %p225
      %s228 = sadd.s32 %s227, 1
      %p231 = scmp.eq.s32.totalorder %s25, 1
      %p232 = scmp.ne.s32.totalorder %s227, %s229
      %p233 = scmp.eq.s32.totalorder %s25, 0
      %p234 = por %p232, %p233
      %p235 = scmp.ne.s32.totalorder %s227, %s229
      %p236 = scmp.eq.s32.totalorder %s30, 1
      %p237 = por %p235, %p236
      %p238 = scmp.ne.s32.totalorder %s229, %s230
      %p239 = scmp.eq.s32.totalorder %s30, 0
      %p240 = por %p238, %p239
      %p241 = scmp.ne.s32.totalorder %s229, %s230
      %p242 = scmp.eq.s32.totalorder %s31, 1
      %p243 = por %p241, %p242
      %p245 = scmp.ne.s32.totalorder %s230, %s244
      %p246 = scmp.eq.s32.totalorder %s31, 0
      %p247 = por %p245, %p246
      %s249 = sadd.s32 %s248, 1
      %p252 = scmp.eq.s32.totalorder %s25, 1
      %p253 = scmp.ne.s32.totalorder %s248, %s250
      %p254 = scmp.eq.s32.totalorder %s25, 0
      %p255 = por %p253, %p254
      %p256 = scmp.ne.s32.totalorder %s248, %s250
      %p257 = scmp.eq.s32.totalorder %s30, 1
      %p258 = por %p256, %p257
      %p259 = scmp.ne.s32.totalorder %s250, %s251
      %p260 = scmp.eq.s32.totalorder %s30, 0
      %p261 = por %p259, %p260
      %p262 = scmp.ne.s32.totalorder %s250, %s251
      %p263 = scmp.eq.s32.totalorder %s31, 1
      %p264 = por %p262, %p263
      %p266 = scmp.ne.s32.totalorder %s251, %s265
      %p267 = scmp.eq.s32.totalorder %s31, 0
      %p268 = por %p266, %p267
      %s270 = sadd.s32 %s269, 1
      %p273 = scmp.eq.s32.totalorder %s25, 1
      %p274 = scmp.ne.s32.totalorder %s269, %s271
      %p275 = scmp.eq.s32.totalorder %s25, 0
      %p276 = por %p274, %p275
      %p277 = scmp.ne.s32.totalorder %s269, %s271
      %p278 = scmp.eq.s32.totalorder %s30, 1
      %p279 = por %p277, %p278
      %p280 = scmp.ne.s32.totalorder %s271, %s272
      %p281 = scmp.eq.s32.totalorder %s30, 0
      %p282 = por %p280, %p281
      %p283 = scmp.ne.s32.totalorder %s271, %s272
      %p284 = scmp.eq.s32.totalorder %s31, 1
      %p285 = por %p283, %p284
      %p287 = scmp.ne.s32.totalorder %s272, %s286
      %p288 = scmp.eq.s32.totalorder %s31, 0
      %p289 = por %p287, %p288
      %s291 = sadd.s32 %s290, 1
      %p294 = scmp.eq.s32.totalorder %s25, 1
      %p295 = scmp.ne.s32.totalorder %s290, %s292
      %p296 = scmp.eq.s32.totalorder %s25, 0
      %p297 = por %p295, %p296
      %p298 = scmp.ne.s32.totalorder %s290, %s292
      %p299 = scmp.eq.s32.totalorder %s30, 1
      %p300 = por %p298, %p299
      %p301 = scmp.ne.s32.totalorder %s292, %s293
      %p302 = scmp.eq.s32.totalorder %s30, 0
      %p303 = por %p301, %p302
      %p304 = scmp.ne.s32.totalorder %s292, %s293
      %p305 = scmp.eq.s32.totalorder %s31, 1
      %p306 = por %p304, %p305
      %p308 = scmp.ne.s32.totalorder %s293, %s307
      %p309 = scmp.eq.s32.totalorder %s31, 0
      %p310 = por %p308, %p309
      %s312 = sadd.s32 %s311, 1
      %p315 = scmp.eq.s32.totalorder %s25, 1
      %p316 = scmp.ne.s32.totalorder %s311, %s313
      %p317 = scmp.eq.s32.totalorder %s25, 0
      %p318 = por %p316, %p317
      %p319 = scmp.ne.s32.totalorder %s311, %s313
      %p320 = scmp.eq.s32.totalorder %s30, 1
      %p321 = por %p319, %p320
      %p322 = scmp.ne.s32.totalorder %s313, %s314
      %p323 = scmp.eq.s32.totalorder %s30, 0
      %p324 = por %p322, %p323
      %p325 = scmp.ne.s32.totalorder %s313, %s314
      %p326 = scmp.eq.s32.totalorder %s31, 1
      %p327 = por %p325, %p326
      %p329 = scmp.ne.s32.totalorder %s314, %s328
      %p330 = scmp.eq.s32.totalorder %s31, 0
      %p331 = por %p329, %p330
      %s333 = sadd.s32 %s332, 1
      %p336 = scmp.eq.s32.totalorder %s25, 1
      %p337 = scmp.ne.s32.totalorder %s332, %s334
      %p338 = scmp.eq.s32.totalorder %s25, 0
      %p339 = por %p337, %p338
      %p340 = scmp.ne.s32.totalorder %s332, %s334
      %p341 = scmp.eq.s32.totalorder %s30, 1
      %p342 = por %p340, %p341
      %p343 = scmp.ne.s32.totalorder %s334, %s335
      %p344 = scmp.eq.s32.totalorder %s30, 0
      %p345 = por %p343, %p344
      %p346 = scmp.ne.s32.totalorder %s334, %s335
      %p347 = scmp.eq.s32.totalorder %s31, 1
      %p348 = por %p346, %p347
      %p350 = scmp.ne.s32.totalorder %s335, %s349
      %p351 = scmp.eq.s32.totalorder %s31, 0
      %p352 = por %p350, %p351
      %s353 = ssub.s32 %s25, %s32
      %p354 = scmp.eq.s32.totalorder %s353, 0
      %s356 = sadd.s32 %s355, 1
      %s357 = scalar_select %p354, %s355, %s356
      %p360 = pneg %p354
      %p361 = scmp.eq.s32.totalorder %s25, 1
      %p362 = por %p360, %p361
      %p363 = scmp.ne.s32.totalorder %s355, %s358
      %p364 = scmp.eq.s32.totalorder %s25, 0
      %p365 = por %p363, %p364
      %p366 = scmp.ne.s32.totalorder %s355, %s358
      %p367 = scmp.eq.s32.totalorder %s30, 1
      %p368 = por %p366, %p367
      %p369 = scmp.ne.s32.totalorder %s358, %s359
      %p370 = scmp.eq.s32.totalorder %s30, 0
      %p371 = por %p369, %p370
      %p372 = scmp.ne.s32.totalorder %s358, %s359
      %p373 = scmp.eq.s32.totalorder %s31, 1
      %p374 = por %p372, %p373
      %p376 = scmp.ne.s32.totalorder %s359, %s375
      %p377 = scmp.eq.s32.totalorder %s31, 0
      %p378 = por %p376, %p377
      %p379 = scmp.le.s32.totalorder 1, %s25
      %p380 = scmp.lt.s32.totalorder %s25, 3
      %p381 = pnand %p379, %p380
      %p382 = pneg %p381
      // Predicated region
      $region9: #{_lambda_.1} parent=5 // pred_check
        _
      $region10: #{_lambda_.1} parent=5 // pred_check_branch
        %384 = sbr.rel (%p381) target = $region12
      $region11: #{_lambda_.1} parent=5 // pred_region
        %s385 = ssub.s32 %s25, 1
        // Predicated region
        $region13: #{_lambda_.1} parent=11 // pred_check
          %p386 = pneg %p72
        $region14: #{_lambda_.1} parent=11 // pred_check_branch
          %388 = sbr.rel (%p386) target = $region16
        $region15: #{_lambda_.1} parent=11 // pred_region
          _
        $region16: #{_lambda_.1} parent=11 // pred_fallthru
          _
        // Predicated region
        $region17: #{_lambda_.1} parent=11 // pred_check
          %p389 = pneg %p93
        $region18: #{_lambda_.1} parent=11 // pred_check_branch
          %391 = sbr.rel (%p389) target = $region20
        $region19: #{_lambda_.1} parent=11 // pred_region
          _
        $region20: #{_lambda_.1} parent=11 // pred_fallthru
          _
        // Predicated region
        $region21: #{_lambda_.1} parent=11 // pred_check
          %p392 = pneg %p114
        $region22: #{_lambda_.1} parent=11 // pred_check_branch
          %394 = sbr.rel (%p392) target = $region24
        $region23: #{_lambda_.1} parent=11 // pred_region
          _
        $region24: #{_lambda_.1} parent=11 // pred_fallthru
          _
        // Predicated region
        $region25: #{_lambda_.1} parent=11 // pred_check
          %p395 = pneg %p135
        $region26: #{_lambda_.1} parent=11 // pred_check_branch
          %397 = sbr.rel (%p395) target = $region28
        $region27: #{_lambda_.1} parent=11 // pred_region
          _
        $region28: #{_lambda_.1} parent=11 // pred_fallthru
          _
        // Predicated region
        $region29: #{_lambda_.1} parent=11 // pred_check
          %p398 = pneg %p156
        $region30: #{_lambda_.1} parent=11 // pred_check_branch
          %400 = sbr.rel (%p398) target = $region32
        $region31: #{_lambda_.1} parent=11 // pred_region
          _
        $region32: #{_lambda_.1} parent=11 // pred_fallthru
          _
        // Predicated region
        $region33: #{_lambda_.1} parent=11 // pred_check
          %p401 = pneg %p177
        $region34: #{_lambda_.1} parent=11 // pred_check_branch
          %403 = sbr.rel (%p401) target = $region36
        $region35: #{_lambda_.1} parent=11 // pred_region
          _
        $region36: #{_lambda_.1} parent=11 // pred_fallthru
          _
        // Predicated region
        $region37: #{_lambda_.1} parent=11 // pred_check
          %p404 = pneg %p198
        $region38: #{_lambda_.1} parent=11 // pred_check_branch
          %406 = sbr.rel (%p404) target = $region40
        $region39: #{_lambda_.1} parent=11 // pred_region
          _
        $region40: #{_lambda_.1} parent=11 // pred_fallthru
          _
        // Predicated region
        $region41: #{_lambda_.1} parent=11 // pred_check
          %p407 = pneg %p219
        $region42: #{_lambda_.1} parent=11 // pred_check_branch
          %409 = sbr.rel (%p407) target = $region44
        $region43: #{_lambda_.1} parent=11 // pred_region
          _
        $region44: #{_lambda_.1} parent=11 // pred_fallthru
          _
        // Predicated region
        $region45: #{_lambda_.1} parent=11 // pred_check
          %p410 = pneg %p240
        $region46: #{_lambda_.1} parent=11 // pred_check_branch
          %412 = sbr.rel (%p410) target = $region48
        $region47: #{_lambda_.1} parent=11 // pred_region
          %s414 = ssub.s32 2048, 2048
          %415 = vsyncadd [#allocation3], %s414
          %s416 = sshll.u32 [#allocation2], 4
          %s417 = int_to_ptr.vmem [resolvable:$true] %s416
          %422 = dma.hbm_to_vmem [thread:$0]  %s9, 2048, %s417, [#allocation3], 128, 128, 8
        $region48: #{_lambda_.1} parent=11 // pred_fallthru
          _
        // Predicated region
        $region49: #{_lambda_.1} parent=11 // pred_check
          %p423 = pneg %p261
        $region50: #{_lambda_.1} parent=11 // pred_check_branch
          %425 = sbr.rel (%p423) target = $region52
        $region51: #{_lambda_.1} parent=11 // pred_region
          _
        $region52: #{_lambda_.1} parent=11 // pred_fallthru
          _
        // Predicated region
        $region53: #{_lambda_.1} parent=11 // pred_check
          %p426 = pneg %p282
        $region54: #{_lambda_.1} parent=11 // pred_check_branch
          %428 = sbr.rel (%p426) target = $region56
        $region55: #{_lambda_.1} parent=11 // pred_region
          _
        $region56: #{_lambda_.1} parent=11 // pred_fallthru
          _
        // Predicated region
        $region57: #{_lambda_.1} parent=11 // pred_check
          %p429 = pneg %p303
        $region58: #{_lambda_.1} parent=11 // pred_check_branch
          %431 = sbr.rel (%p429) target = $region60
        $region59: #{_lambda_.1} parent=11 // pred_region
          _
        $region60: #{_lambda_.1} parent=11 // pred_fallthru
          _
        // Predicated region
        $region61: #{_lambda_.1} parent=11 // pred_check
          %p432 = pneg %p324
        $region62: #{_lambda_.1} parent=11 // pred_check_branch
          %434 = sbr.rel (%p432) target = $region64
        $region63: #{_lambda_.1} parent=11 // pred_region
          _
        $region64: #{_lambda_.1} parent=11 // pred_fallthru
          _
        // Predicated region
        $region65: #{_lambda_.1} parent=11 // pred_check
          %p435 = pneg %p345
        $region66: #{_lambda_.1} parent=11 // pred_check_branch
          %437 = sbr.rel (%p435) target = $region68
        $region67: #{_lambda_.1} parent=11 // pred_region
          _
        $region68: #{_lambda_.1} parent=11 // pred_fallthru
          _
      $region12: #{_lambda_.1} parent=5 // pred_fallthru
        _
      %p438 = scmp.lt.s32.totalorder %s25, 2
      // Predicated region
      $region69: #{_lambda_.1} parent=5 // pred_check
        %p439 = pneg %p438
      $region70: #{_lambda_.1} parent=5 // pred_check_branch
        %441 = sbr.rel (%p439) target = $region72
      $region71: #{_lambda_.1} parent=5 // pred_region
        // Predicated region
        $region73: #{_lambda_.1} parent=71 // pred_check
          %p442 = pneg %p45
        $region74: #{_lambda_.1} parent=71 // pred_check_branch
          %444 = sbr.rel (%p442) target = $region76
        $region75: #{_lambda_.1} parent=71 // pred_region
          %p445 = scmp.lt.s32.totalorder %s25, 1
          %s446 = scalar_select %p445, %s25, 1
          %s447 = smul.addr %s446, 8
          %s448 = scalar_lea.vmem %s0, %s447
        $region76: #{_lambda_.1} parent=71 // pred_fallthru
          _
      $region72: #{_lambda_.1} parent=5 // pred_fallthru
        _
      %p449 = scmp.le.s32.totalorder 1, %s25
      %p450 = scmp.lt.s32.totalorder %s25, 3
      %p451 = pnand %p449, %p450
      %p452 = pneg %p451
      // Predicated region
      $region77: #{_lambda_.1} parent=5 // pred_check
        _
      $region78: #{_lambda_.1} parent=5 // pred_check_branch
        %454 = sbr.rel (%p451) target = $region80
      $region79: #{_lambda_.1} parent=5 // pred_region
        %s455 = ssub.s32 %s25, 1
        // Predicated region
        $region81: #{_lambda_.1} parent=79 // pred_check
          %p456 = pneg %p240
        $region82: #{_lambda_.1} parent=79 // pred_check_branch
          %458 = sbr.rel (%p456) target = $region84
        $region83: #{_lambda_.1} parent=79 // pred_region
          %459 = dma.done [#allocation3], 2048
        $region84: #{_lambda_.1} parent=79 // pred_fallthru
          _
        %p460 = scmp.lt.s32.totalorder %s30, 1
        %s461 = scalar_select %p460, %s30, 1
        %s462 = smul.addr %s461, 8
        %s463 = scalar_lea.vmem %s0, %s462
        %p464 = pneg %p51
        %p465 = pneg %p48
        %p466 = pneg %p72
        %p467 = pneg %p69
        %p468 = pneg %p93
        %p469 = pneg %p90
        %p470 = pneg %p114
        %p471 = pneg %p111
        %p472 = pneg %p135
        %p473 = pneg %p132
        %p474 = pneg %p156
        %p475 = pneg %p153
        %p476 = pneg %p177
        %p477 = pneg %p174
        %p478 = pneg %p198
        %p479 = pneg %p195
        %p480 = pneg %p219
        %p481 = pneg %p216
        %p482 = pneg %p240
        %p483 = pneg %p237
        %p484 = pneg %p261
        %p485 = pneg %p258
        %p486 = pneg %p282
        %p487 = pneg %p279
        %p488 = pneg %p303
        %p489 = pneg %p300
        %p490 = pneg %p324
        %p491 = pneg %p321
        %p492 = pneg %p345
        %p493 = pneg %p342
        %p494 = pneg %p371
        %p495 = pneg %p368
        %s496 = sand.u32 %s358, 1
        %s497 = scalar_lea.sflag [#allocation4], %s496
        %s498 = sand.u32 %s358, 1
        %s499 = smul.addr %s498, 8
        %s500 = scalar_lea.vmem [#allocation5], %s499
        %p501 = scmp.lt.s32.totalorder %s30, 1
        %s502 = scalar_select %p501, %s30, 1
        %s503 = smul.addr %s502, 8
        %s504 = scalar_lea.vmem %s0, %s503
        %v505 = vld [vmem:[%s504] sm:$0xff]
        %vm506 = vcmask 130048
        %v507 = vsel %vm506, %v505, 0.0
        %508 = vadd.xlane.f32.xlu0 %v507
        %v509 = vpop.xlane.xlu0 %508
        %v510 = vrcp.pop 16.0
        %v511 = vmul.f32 %v509, %v510
        %v512 = vsub.f32 %v505, %v511
        %v513 = vmul.f32 %v512, %v512
        %v514 = vsel %vm506, %v513, 0.0
        %515 = vadd.xlane.f32.xlu0 %v514
        %v516 = vpop.xlane.xlu0 %515
        %v517 = vmul.f32 %v516, 0.06666667
        %v518 = vadd.f32 %v517, 1e-05
        %v519 = vrsqrt.pop %v518
        %v520 = vmul.f32 %v518, %v519
        %v521 = vmul.f32 %v512, %v519
        %v522 = vld [vmem:[%s1] sm:$0xff]
        %v523 = vld [vmem:[%s1 + $0x8] sm:$0xff]
        %v524 = vld [vmem:[%s2] sm:$0x1]
        %v526 = vlaneseq
        %v527 = vshrl.u32 %v526, 7
        %v528 = vsub.s32 0, %v527
        %v529 = vrot.slane %v524, %v528
        %v532 = vsel %vm506, %v521, 0
        %534 = vmatprep.subr.mxu0 0.0
        %535 = vmatpush1.msra.mxu0 0.0
        %536 = vmatprep.subr.mxu0 0.0
        %537 = vmatpush1.msra.mxu0 0.0
        %538 = vmatprep.subr.mxu0 0.0
        %539 = vmatpush1.msra.mxu0 0.0
        %540 = vmatprep.subr.mxu0 0.0
        %541 = vmatpush1.msra.mxu0 0.0
        %542 = vmatprep.subr.mxu0 0.0
        %543 = vmatpush1.msra.mxu0 0.0
        %544 = vmatprep.subr.mxu0 0.0
        %545 = vmatpush1.msra.mxu0 0.0
        %546 = vmatprep.subr.mxu0 0.0
        %547 = vmatpush1.msra.mxu0 0.0
        %548 = vmatprep.subr.mxu0 0.0
        %549 = vmatpush1.msra.mxu0 0.0
        %550 = vmatprep.subr.mxu0 0.0
        %551 = vmatpush1.msra.mxu0 0.0
        %552 = vmatprep.subr.mxu0 0.0
        %553 = vmatpush1.msra.mxu0 0.0
        %554 = vmatprep.subr.mxu0 0.0
        %555 = vmatpush1.msra.mxu0 0.0
        %556 = vmatprep.subr.mxu0 0.0
        %557 = vmatpush1.msra.mxu0 0.0
        %558 = vmatprep.subr.mxu0 0.0
        %559 = vmatpush1.msra.mxu0 0.0
        %560 = vmatprep.subr.mxu0 0.0
        %561 = vmatpush1.msra.mxu0 0.0
        %562 = vmatprep.subr.mxu0 0.0
        %563 = vmatpush1.msra.mxu0 %v523
        %564 = vmatprep.subr.mxu0 0.0
        %565 = vmatpush1.msra.mxu0 %v522
        %566 = vmatprep.subr.mxu0 0.0
        %567 = vmatpush2.msra.mxu0 0.0
        %568 = vmatprep.subr.mxu0 0.0
        %569 = vmatpush2.msra.mxu0 0.0
        %570 = vmatprep.subr.mxu0 0.0
        %571 = vmatpush2.msra.mxu0 0.0
        %572 = vmatprep.subr.mxu0 0.0
        %573 = vmatpush2.msra.mxu0 0.0
        %574 = vmatprep.subr.mxu0 0.0
        %575 = vmatpush2.msra.mxu0 0.0
        %576 = vmatprep.subr.mxu0 0.0
        %577 = vmatpush2.msra.mxu0 0.0
        %578 = vmatprep.subr.mxu0 0.0
        %579 = vmatpush2.msra.mxu0 0.0
        %580 = vmatprep.subr.mxu0 0.0
        %581 = vmatpush2.msra.mxu0 0.0
        %582 = vmatprep.subr.mxu0 0.0
        %583 = vmatpush2.msra.mxu0 0.0
        %584 = vmatprep.subr.mxu0 0.0
        %585 = vmatpush2.msra.mxu0 0.0
        %586 = vmatprep.subr.mxu0 0.0
        %587 = vmatpush2.msra.mxu0 0.0
        %588 = vmatprep.subr.mxu0 0.0
        %589 = vmatpush2.msra.mxu0 0.0
        %590 = vmatprep.subr.mxu0 0.0
        %591 = vmatpush2.msra.mxu0 0.0
        %592 = vmatprep.subr.mxu0 0.0
        %593 = vmatpush2.msra.mxu0 0.0
        %594 = vmatprep.subr.mxu0 0.0
        %595 = vmatpush2.msra.mxu0 0.0
        %596 = vmatprep.subr.mxu0 0.0
        %597 = vmatpush2.msra.mxu0 0.0
        %598 = vmatprep.mubr.f32.mxu0 0.0
        %599 = vmatmul.mubr.f32.gmra.mxu0 %v532
        %v600 = vpop.f32.mrf.mxu0
        %v601 = vadd.f32 %v529, %v600
        %v602 = vpop.f32.mrf.mxu0
        %603 = vdwg.mxu0
        %v604 = vld [vmem:[%s3] sm:$0xff]
        %v605 = vld [vmem:[%s3 + $0x8] sm:$0xff]
        %v606 = vld [vmem:[%s3 + $0x10] sm:$0xff]
        %v607 = vld [vmem:[%s3 + $0x18] sm:$0xf]
        %v608 = vld [vmem:[%s4] sm:$0x1]
        %v610 = vlaneseq
        %v611 = vshrl.u32 %v610, 7
        %v612 = vsub.s32 0, %v611
        %v613 = vrot.slane %v608, %v612
        %vm615 = vcmask 228352
        %v617 = vsel %vm615, %v601, 0
        %vm619 = vcmask 1043456
        %v621 = vsel %vm619, %v607, 0
        %623 = vmatprep.subr.mxu0 0.0
        %624 = vmatpush1.msra.mxu0 0.0
        %625 = vmatprep.subr.mxu0 0.0
        %626 = vmatpush1.msra.mxu0 0.0
        %627 = vmatprep.subr.mxu0 0.0
        %628 = vmatpush1.msra.mxu0 0.0
        %629 = vmatprep.subr.mxu0 0.0
        %630 = vmatpush1.msra.mxu0 0.0
        %631 = vmatprep.subr.mxu0 0.0
        %632 = vmatpush1.msra.mxu0 0.0
        %633 = vmatprep.subr.mxu0 0.0
        %634 = vmatpush1.msra.mxu0 0.0
        %635 = vmatprep.subr.mxu0 0.0
        %636 = vmatpush1.msra.mxu0 0.0
        %637 = vmatprep.subr.mxu0 0.0
        %638 = vmatpush1.msra.mxu0 0.0
        %639 = vmatprep.subr.mxu0 0.0
        %640 = vmatpush1.msra.mxu0 0.0
        %641 = vmatprep.subr.mxu0 0.0
        %642 = vmatpush1.msra.mxu0 0.0
        %643 = vmatprep.subr.mxu0 0.0
        %644 = vmatpush1.msra.mxu0 0.0
        %645 = vmatprep.subr.mxu0 0.0
        %646 = vmatpush1.msra.mxu0 0.0
        %647 = vmatprep.subr.mxu0 0.0
        %648 = vmatpush1.msra.mxu0 %v621
        %649 = vmatprep.subr.mxu0 0.0
        %650 = vmatpush1.msra.mxu0 %v606
        %651 = vmatprep.subr.mxu0 0.0
        %652 = vmatpush1.msra.mxu0 %v605
        %653 = vmatprep.subr.mxu0 0.0
        %654 = vmatpush1.msra.mxu0 %v604
        %655 = vmatprep.subr.mxu0 0.0
        %656 = vmatpush2.msra.mxu0 0.0
        %657 = vmatprep.subr.mxu0 0.0
        %658 = vmatpush2.msra.mxu0 0.0
        %659 = vmatprep.subr.mxu0 0.0
        %660 = vmatpush2.msra.mxu0 0.0
        %661 = vmatprep.subr.mxu0 0.0
        %662 = vmatpush2.msra.mxu0 0.0
        %663 = vmatprep.subr.mxu0 0.0
        %664 = vmatpush2.msra.mxu0 0.0
        %665 = vmatprep.subr.mxu0 0.0
        %666 = vmatpush2.msra.mxu0 0.0
        %667 = vmatprep.subr.mxu0 0.0
        %668 = vmatpush2.msra.mxu0 0.0
        %669 = vmatprep.subr.mxu0 0.0
        %670 = vmatpush2.msra.mxu0 0.0
        %671 = vmatprep.subr.mxu0 0.0
        %672 = vmatpush2.msra.mxu0 0.0
        %673 = vmatprep.subr.mxu0 0.0
        %674 = vmatpush2.msra.mxu0 0.0
        %675 = vmatprep.subr.mxu0 0.0
        %676 = vmatpush2.msra.mxu0 0.0
        %677 = vmatprep.subr.mxu0 0.0
        %678 = vmatpush2.msra.mxu0 0.0
        %679 = vmatprep.subr.mxu0 0.0
        %680 = vmatpush2.msra.mxu0 0.0
        %681 = vmatprep.subr.mxu0 0.0
        %682 = vmatpush2.msra.mxu0 0.0
        %683 = vmatprep.subr.mxu0 0.0
        %684 = vmatpush2.msra.mxu0 0.0
        %685 = vmatprep.subr.mxu0 0.0
        %686 = vmatpush2.msra.mxu0 0.0
        %687 = vmatprep.mubr.f32.mxu0 0.0
        %688 = vmatmul.mubr.f32.gmra.mxu0 %v617
        %v689 = vpop.f32.mrf.mxu0
        %v690 = vadd.f32 %v613, %v689
        %v691 = vpop.f32.mrf.mxu0
        %692 = vdwg.mxu0
        %v693 = vld [vmem:[%s5] sm:$0xff]
        %v694 = vld [vmem:[%s5 + $0x8] sm:$0xff]
        %v695 = vld [vmem:[%s5 + $0x10] sm:$0xff]
        %v696 = vld [vmem:[%s5 + $0x18] sm:$0xff]
        %v697 = vld [vmem:[%s5 + $0x20] sm:$0xff]
        %v698 = vld [vmem:[%s5 + $0x28] sm:$0xff]
        %v699 = vld [vmem:[%s5 + $0x30] sm:$0xff]
        %v700 = vld [vmem:[%s5 + $0x38] sm:$0xff]
        %v701 = vld [vmem:[%s5 + $0x40] sm:$0xff]
        %v702 = vld [vmem:[%s5 + $0x48] sm:$0xff]
        %v703 = vld [vmem:[%s5 + $0x50] sm:$0xff]
        %v704 = vld [vmem:[%s5 + $0x58] sm:$0xff]
        %v705 = vld [vmem:[%s5 + $0x60] sm:$0xff]
        %v706 = vld [vmem:[%s5 + $0x68] sm:$0xff]
        %v707 = vld [vmem:[%s5 + $0x70] sm:$0xff]
        %v708 = vld [vmem:[%s5 + $0x78] sm:$0xff]
        %v709 = vld [vmem:[%s6] sm:$0x3]
        %v711 = vlaneseq
        %v712 = vshrl.u32 %v711, 7
        %v713 = vsub.s32 0, %v712
        %v714 = vrot.slane %v709, %v713
        %v715 = vlaneseq
        %v716 = vshrl.u32 %v715, 7
        %v717 = vsub.s32 1, %v716
        %v718 = vrot.slane %v709, %v717
        %vm721 = vcmask 523264
        %v723 = vsel %vm721, %v690, 0
        %725 = vmatprep.subr.mxu0 0.0
        %726 = vmatpush1.msra.mxu0 0.0
        %727 = vmatprep.subr.mxu0 0.0
        %728 = vmatpush1.msra.mxu0 0.0
        %729 = vmatprep.subr.mxu0 0.0
        %730 = vmatpush1.msra.mxu0 0.0
        %731 = vmatprep.subr.mxu0 0.0
        %732 = vmatpush1.msra.mxu0 0.0
        %733 = vmatprep.subr.mxu0 0.0
        %734 = vmatpush1.msra.mxu0 0.0
        %735 = vmatprep.subr.mxu0 0.0
        %736 = vmatpush1.msra.mxu0 0.0
        %737 = vmatprep.subr.mxu0 0.0
        %738 = vmatpush1.msra.mxu0 0.0
        %739 = vmatprep.subr.mxu0 0.0
        %740 = vmatpush1.msra.mxu0 0.0
        %741 = vmatprep.subr.mxu0 %v708
        %742 = vmatpush1.msra.mxu0 %v707
        %743 = vmatprep.subr.mxu0 %v706
        %744 = vmatpush1.msra.mxu0 %v705
        %745 = vmatprep.subr.mxu0 %v704
        %746 = vmatpush1.msra.mxu0 %v703
        %747 = vmatprep.subr.mxu0 %v702
        %748 = vmatpush1.msra.mxu0 %v701
        %749 = vmatprep.subr.mxu0 %v700
        %750 = vmatpush1.msra.mxu0 %v699
        %751 = vmatprep.subr.mxu0 %v698
        %752 = vmatpush1.msra.mxu0 %v697
        %753 = vmatprep.subr.mxu0 %v696
        %754 = vmatpush1.msra.mxu0 %v695
        %755 = vmatprep.subr.mxu0 %v694
        %756 = vmatpush1.msra.mxu0 %v693
        %757 = vmatprep.subr.mxu0 0.0
        %758 = vmatpush2.msra.mxu0 0.0
        %759 = vmatprep.subr.mxu0 0.0
        %760 = vmatpush2.msra.mxu0 0.0
        %761 = vmatprep.subr.mxu0 0.0
        %762 = vmatpush2.msra.mxu0 0.0
        %763 = vmatprep.subr.mxu0 0.0
        %764 = vmatpush2.msra.mxu0 0.0
        %765 = vmatprep.subr.mxu0 0.0
        %766 = vmatpush2.msra.mxu0 0.0
        %767 = vmatprep.subr.mxu0 0.0
        %768 = vmatpush2.msra.mxu0 0.0
        %769 = vmatprep.subr.mxu0 0.0
        %770 = vmatpush2.msra.mxu0 0.0
        %771 = vmatprep.subr.mxu0 0.0
        %772 = vmatpush2.msra.mxu0 0.0
        %773 = vmatprep.subr.mxu0 0.0
        %774 = vmatpush2.msra.mxu0 0.0
        %775 = vmatprep.subr.mxu0 0.0
        %776 = vmatpush2.msra.mxu0 0.0
        %777 = vmatprep.subr.mxu0 0.0
        %778 = vmatpush2.msra.mxu0 0.0
        %779 = vmatprep.subr.mxu0 0.0
        %780 = vmatpush2.msra.mxu0 0.0
        %781 = vmatprep.subr.mxu0 0.0
        %782 = vmatpush2.msra.mxu0 0.0
        %783 = vmatprep.subr.mxu0 0.0
        %784 = vmatpush2.msra.mxu0 0.0
        %785 = vmatprep.subr.mxu0 0.0
        %786 = vmatpush2.msra.mxu0 0.0
        %787 = vmatprep.subr.mxu0 0.0
        %788 = vmatpush2.msra.mxu0 0.0
        %789 = vmatprep.mubr.f32.mxu0 0.0
        %790 = vmatmul.mubr.f32.gmra.mxu0 %v723
        %v791 = vpop.f32.mrf.mxu0
        %v792 = vadd.f32 %v714, %v791
        %v793 = vpop.f32.mrf.mxu0
        %v794 = vadd.f32 %v718, %v793
        %795 = vdwg.mxu0
        %797 = vrot.lane.b32.xlu0 %v792, 64
        %v798 = vpop.permute.xlu0 %797
        %vm799 = vcmask 261120
        %v800 = vsel %vm799, %v792, 0
        %v802 = vsel %vm799, %v798, 0
        %804 = vmatprep.subr.mxu0 0.0
        %805 = vmatpush1.xpose.msra.mxu0 0.0
        %806 = vmatprep.subr.mxu0 0.0
        %807 = vmatpush1.xpose.msra.mxu0 0.0
        %808 = vmatprep.subr.mxu0 0.0
        %809 = vmatpush1.xpose.msra.mxu0 0.0
        %810 = vmatprep.subr.mxu0 0.0
        %811 = vmatpush1.xpose.msra.mxu0 0.0
        %812 = vmatprep.subr.mxu0 0.0
        %813 = vmatpush1.xpose.msra.mxu0 0.0
        %814 = vmatprep.subr.mxu0 0.0
        %815 = vmatpush1.xpose.msra.mxu0 0.0
        %816 = vmatprep.subr.mxu0 0.0
        %817 = vmatpush1.xpose.msra.mxu0 0.0
        %818 = vmatprep.subr.mxu0 0.0
        %819 = vmatpush1.xpose.msra.mxu0 0.0
        %820 = vmatprep.subr.mxu0 0.0
        %821 = vmatpush1.xpose.msra.mxu0 0.0
        %822 = vmatprep.subr.mxu0 0.0
        %823 = vmatpush1.xpose.msra.mxu0 0.0
        %824 = vmatprep.subr.mxu0 0.0
        %825 = vmatpush1.xpose.msra.mxu0 0.0
        %826 = vmatprep.subr.mxu0 0.0
        %827 = vmatpush1.xpose.msra.mxu0 0.0
        %828 = vmatprep.subr.mxu0 0.0
        %829 = vmatpush1.xpose.msra.mxu0 0.0
        %830 = vmatprep.subr.mxu0 0.0
        %831 = vmatpush1.xpose.msra.mxu0 0.0
        %832 = vmatprep.subr.mxu0 0.0
        %833 = vmatpush1.xpose.msra.mxu0 0.0
        %834 = vmatprep.subr.mxu0 0.0
        %835 = vmatpush1.xpose.msra.mxu0 %v802
        %836 = vmatprep.subr.mxu0 0.0
        %837 = vmatpush2.xpose.msra.mxu0 0.0
        %838 = vmatprep.subr.mxu0 0.0
        %839 = vmatpush2.xpose.msra.mxu0 0.0
        %840 = vmatprep.subr.mxu0 0.0
        %841 = vmatpush2.xpose.msra.mxu0 0.0
        %842 = vmatprep.subr.mxu0 0.0
        %843 = vmatpush2.xpose.msra.mxu0 0.0
        %844 = vmatprep.subr.mxu0 0.0
        %845 = vmatpush2.xpose.msra.mxu0 0.0
        %846 = vmatprep.subr.mxu0 0.0
        %847 = vmatpush2.xpose.msra.mxu0 0.0
        %848 = vmatprep.subr.mxu0 0.0
        %849 = vmatpush2.xpose.msra.mxu0 0.0
        %850 = vmatprep.subr.mxu0 0.0
        %851 = vmatpush2.xpose.msra.mxu0 0.0
        %852 = vmatprep.subr.mxu0 0.0
        %853 = vmatpush2.xpose.msra.mxu0 0.0
        %854 = vmatprep.subr.mxu0 0.0
        %855 = vmatpush2.xpose.msra.mxu0 0.0
        %856 = vmatprep.subr.mxu0 0.0
        %857 = vmatpush2.xpose.msra.mxu0 0.0
        %858 = vmatprep.subr.mxu0 0.0
        %859 = vmatpush2.xpose.msra.mxu0 0.0
        %860 = vmatprep.subr.mxu0 0.0
        %861 = vmatpush2.xpose.msra.mxu0 0.0
        %862 = vmatprep.subr.mxu0 0.0
        %863 = vmatpush2.xpose.msra.mxu0 0.0
        %864 = vmatprep.subr.mxu0 0.0
        %865 = vmatpush2.xpose.msra.mxu0 0.0
        %866 = vmatprep.subr.mxu0 0.0
        %867 = vmatpush2.xpose.msra.mxu0 0.0
        %868 = vmatprep.mubr.f32.mxu0 0.0
        %869 = vmatmul.mubr.f32.gmra.mxu0 %v800
        %v870 = vpop.f32.mrf.mxu0
        %v871 = vadd.f32 0.0, %v870
        %v872 = vpop.f32.mrf.mxu0
        %873 = vdwg.mxu0
        %vm874 = vcmask 64512
        %v875 = vsel %vm874, %v871, -inf
        %876 = vmax.xlane.f32.xlu0 %v875
        %v877 = vpop.xlane.xlu0 %876
        %v878 = vsub.f32 %v871, %v877
        %v879 = vmul.f32 %v878, 1.442695
        %v880 = vpow.pop %v879
        %v881 = vsel %vm874, %v880, 0.0
        %882 = vadd.xlane.f32.xlu0 %v881
        %v883 = vpop.xlane.xlu0 %882
        %v884 = vrcp.pop %v883
        %v885 = vmul.f32 %v880, %v884
        %v887 = vsel %vm874, %v885, 0
        %889 = vmatprep.subr.mxu0 0.0
        %890 = vmatpush1.msra.mxu0 0.0
        %891 = vmatprep.subr.mxu0 0.0
        %892 = vmatpush1.msra.mxu0 0.0
        %893 = vmatprep.subr.mxu0 0.0
        %894 = vmatpush1.msra.mxu0 0.0
        %895 = vmatprep.subr.mxu0 0.0
        %896 = vmatpush1.msra.mxu0 0.0
        %897 = vmatprep.subr.mxu0 0.0
        %898 = vmatpush1.msra.mxu0 0.0
        %899 = vmatprep.subr.mxu0 0.0
        %900 = vmatpush1.msra.mxu0 0.0
        %901 = vmatprep.subr.mxu0 0.0
        %902 = vmatpush1.msra.mxu0 0.0
        %903 = vmatprep.subr.mxu0 0.0
        %904 = vmatpush1.msra.mxu0 0.0
        %905 = vmatprep.subr.mxu0 0.0
        %906 = vmatpush1.msra.mxu0 0.0
        %907 = vmatprep.subr.mxu0 0.0
        %908 = vmatpush1.msra.mxu0 0.0
        %909 = vmatprep.subr.mxu0 0.0
        %910 = vmatpush1.msra.mxu0 0.0
        %911 = vmatprep.subr.mxu0 0.0
        %912 = vmatpush1.msra.mxu0 0.0
        %913 = vmatprep.subr.mxu0 0.0
        %914 = vmatpush1.msra.mxu0 0.0
        %915 = vmatprep.subr.mxu0 0.0
        %916 = vmatpush1.msra.mxu0 0.0
        %917 = vmatprep.subr.mxu0 0.0
        %918 = vmatpush1.msra.mxu0 0.0
        %919 = vmatprep.subr.mxu0 0.0
        %920 = vmatpush1.msra.mxu0 %v794
        %921 = vmatprep.subr.mxu0 0.0
        %922 = vmatpush2.msra.mxu0 0.0
        %923 = vmatprep.subr.mxu0 0.0
        %924 = vmatpush2.msra.mxu0 0.0
        %925 = vmatprep.subr.mxu0 0.0
        %926 = vmatpush2.msra.mxu0 0.0
        %927 = vmatprep.subr.mxu0 0.0
        %928 = vmatpush2.msra.mxu0 0.0
        %929 = vmatprep.subr.mxu0 0.0
        %930 = vmatpush2.msra.mxu0 0.0
        %931 = vmatprep.subr.mxu0 0.0
        %932 = vmatpush2.msra.mxu0 0.0
        %933 = vmatprep.subr.mxu0 0.0
        %934 = vmatpush2.msra.mxu0 0.0
        %935 = vmatprep.subr.mxu0 0.0
        %936 = vmatpush2.msra.mxu0 0.0
        %937 = vmatprep.subr.mxu0 0.0
        %938 = vmatpush2.msra.mxu0 0.0
        %939 = vmatprep.subr.mxu0 0.0
        %940 = vmatpush2.msra.mxu0 0.0
        %941 = vmatprep.subr.mxu0 0.0
        %942 = vmatpush2.msra.mxu0 0.0
        %943 = vmatprep.subr.mxu0 0.0
        %944 = vmatpush2.msra.mxu0 0.0
        %945 = vmatprep.subr.mxu0 0.0
        %946 = vmatpush2.msra.mxu0 0.0
        %947 = vmatprep.subr.mxu0 0.0
        %948 = vmatpush2.msra.mxu0 0.0
        %949 = vmatprep.subr.mxu0 0.0
        %950 = vmatpush2.msra.mxu0 0.0
        %951 = vmatprep.subr.mxu0 0.0
        %952 = vmatpush2.msra.mxu0 0.0
        %953 = vmatprep.mubr.f32.mxu0 0.0
        %954 = vmatmul.mubr.f32.gmra.mxu0 %v887
        %v955 = vpop.f32.mrf.mxu0
        %v956 = vadd.f32 0.0, %v955
        %v957 = vpop.f32.mrf.mxu0
        %958 = vdwg.mxu0
        %959 = vrot.lane.b32.xlu0 %v792, 96
        %v960 = vpop.permute.xlu0 %959
        %961 = vrot.lane.b32.xlu0 %v792, 32
        %v962 = vpop.permute.xlu0 %961
        %v963 = vsel %vm799, %v960, 0
        %v965 = vsel %vm799, %v962, 0
        %967 = vmatprep.subr.mxu0 0.0
        %968 = vmatpush1.xpose.msra.mxu0 0.0
        %969 = vmatprep.subr.mxu0 0.0
        %970 = vmatpush1.xpose.msra.mxu0 0.0
        %971 = vmatprep.subr.mxu0 0.0
        %972 = vmatpush1.xpose.msra.mxu0 0.0
        %973 = vmatprep.subr.mxu0 0.0
        %974 = vmatpush1.xpose.msra.mxu0 0.0
        %975 = vmatprep.subr.mxu0 0.0
        %976 = vmatpush1.xpose.msra.mxu0 0.0
        %977 = vmatprep.subr.mxu0 0.0
        %978 = vmatpush1.xpose.msra.mxu0 0.0
        %979 = vmatprep.subr.mxu0 0.0
        %980 = vmatpush1.xpose.msra.mxu0 0.0
        %981 = vmatprep.subr.mxu0 0.0
        %982 = vmatpush1.xpose.msra.mxu0 0.0
        %983 = vmatprep.subr.mxu0 0.0
        %984 = vmatpush1.xpose.msra.mxu0 0.0
        %985 = vmatprep.subr.mxu0 0.0
        %986 = vmatpush1.xpose.msra.mxu0 0.0
        %987 = vmatprep.subr.mxu0 0.0
        %988 = vmatpush1.xpose.msra.mxu0 0.0
        %989 = vmatprep.subr.mxu0 0.0
        %990 = vmatpush1.xpose.msra.mxu0 0.0
        %991 = vmatprep.subr.mxu0 0.0
        %992 = vmatpush1.xpose.msra.mxu0 0.0
        %993 = vmatprep.subr.mxu0 0.0
        %994 = vmatpush1.xpose.msra.mxu0 0.0
        %995 = vmatprep.subr.mxu0 0.0
        %996 = vmatpush1.xpose.msra.mxu0 0.0
        %997 = vmatprep.subr.mxu0 0.0
        %998 = vmatpush1.xpose.msra.mxu0 %v965
        %999 = vmatprep.subr.mxu0 0.0
        %1000 = vmatpush2.xpose.msra.mxu0 0.0
        %1001 = vmatprep.subr.mxu0 0.0
        %1002 = vmatpush2.xpose.msra.mxu0 0.0
        %1003 = vmatprep.subr.mxu0 0.0
        %1004 = vmatpush2.xpose.msra.mxu0 0.0
        %1005 = vmatprep.subr.mxu0 0.0
        %1006 = vmatpush2.xpose.msra.mxu0 0.0
        %1007 = vmatprep.subr.mxu0 0.0
        %1008 = vmatpush2.xpose.msra.mxu0 0.0
        %1009 = vmatprep.subr.mxu0 0.0
        %1010 = vmatpush2.xpose.msra.mxu0 0.0
        %1011 = vmatprep.subr.mxu0 0.0
        %1012 = vmatpush2.xpose.msra.mxu0 0.0
        %1013 = vmatprep.subr.mxu0 0.0
        %1014 = vmatpush2.xpose.msra.mxu0 0.0
        %1015 = vmatprep.subr.mxu0 0.0
        %1016 = vmatpush2.xpose.msra.mxu0 0.0
        %1017 = vmatprep.subr.mxu0 0.0
        %1018 = vmatpush2.xpose.msra.mxu0 0.0
        %1019 = vmatprep.subr.mxu0 0.0
        %1020 = vmatpush2.xpose.msra.mxu0 0.0
        %1021 = vmatprep.subr.mxu0 0.0
        %1022 = vmatpush2.xpose.msra.mxu0 0.0
        %1023 = vmatprep.subr.mxu0 0.0
        %1024 = vmatpush2.xpose.msra.mxu0 0.0
        %1025 = vmatprep.subr.mxu0 0.0
        %1026 = vmatpush2.xpose.msra.mxu0 0.0
        %1027 = vmatprep.subr.mxu0 0.0
        %1028 = vmatpush2.xpose.msra.mxu0 0.0
        %1029 = vmatprep.subr.mxu0 0.0
        %1030 = vmatpush2.xpose.msra.mxu0 0.0
        %1031 = vmatprep.mubr.f32.mxu0 0.0
        %1032 = vmatmul.mubr.f32.gmra.mxu0 %v963
        %v1033 = vpop.f32.mrf.mxu0
        %v1034 = vadd.f32 0.0, %v1033
        %v1035 = vpop.f32.mrf.mxu0
        %1036 = vdwg.mxu0
        %v1037 = vsel %vm874, %v1034, -inf
        %1038 = vmax.xlane.f32.xlu0 %v1037
        %v1039 = vpop.xlane.xlu0 %1038
        %v1040 = vsub.f32 %v1034, %v1039
        %v1041 = vmul.f32 %v1040, 1.442695
        %v1042 = vpow.pop %v1041
        %v1043 = vsel %vm874, %v1042, 0.0
        %1044 = vadd.xlane.f32.xlu0 %v1043
        %v1045 = vpop.xlane.xlu0 %1044
        %v1046 = vrcp.pop %v1045
        %v1047 = vmul.f32 %v1042, %v1046
        %1049 = vrot.lane.b32.xlu0 %v794, 96
        %v1050 = vpop.permute.xlu0 %1049
        %v1053 = vsel %vm874, %v1047, 0
        %1055 = vmatprep.subr.mxu0 0.0
        %1056 = vmatpush1.msra.mxu0 0.0
        %1057 = vmatprep.subr.mxu0 0.0
        %1058 = vmatpush1.msra.mxu0 0.0
        %1059 = vmatprep.subr.mxu0 0.0
        %1060 = vmatpush1.msra.mxu0 0.0
        %1061 = vmatprep.subr.mxu0 0.0
        %1062 = vmatpush1.msra.mxu0 0.0
        %1063 = vmatprep.subr.mxu0 0.0
        %1064 = vmatpush1.msra.mxu0 0.0
        %1065 = vmatprep.subr.mxu0 0.0
        %1066 = vmatpush1.msra.mxu0 0.0
        %1067 = vmatprep.subr.mxu0 0.0
        %1068 = vmatpush1.msra.mxu0 0.0
        %1069 = vmatprep.subr.mxu0 0.0
        %1070 = vmatpush1.msra.mxu0 0.0
        %1071 = vmatprep.subr.mxu0 0.0
        %1072 = vmatpush1.msra.mxu0 0.0
        %1073 = vmatprep.subr.mxu0 0.0
        %1074 = vmatpush1.msra.mxu0 0.0
        %1075 = vmatprep.subr.mxu0 0.0
        %1076 = vmatpush1.msra.mxu0 0.0
        %1077 = vmatprep.subr.mxu0 0.0
        %1078 = vmatpush1.msra.mxu0 0.0
        %1079 = vmatprep.subr.mxu0 0.0
        %1080 = vmatpush1.msra.mxu0 0.0
        %1081 = vmatprep.subr.mxu0 0.0
        %1082 = vmatpush1.msra.mxu0 0.0
        %1083 = vmatprep.subr.mxu0 0.0
        %1084 = vmatpush1.msra.mxu0 0.0
        %1085 = vmatprep.subr.mxu0 0.0
        %1086 = vmatpush1.msra.mxu0 %v1050
        %1087 = vmatprep.subr.mxu0 0.0
        %1088 = vmatpush2.msra.mxu0 0.0
        %1089 = vmatprep.subr.mxu0 0.0
        %1090 = vmatpush2.msra.mxu0 0.0
        %1091 = vmatprep.subr.mxu0 0.0
        %1092 = vmatpush2.msra.mxu0 0.0
        %1093 = vmatprep.subr.mxu0 0.0
        %1094 = vmatpush2.msra.mxu0 0.0
        %1095 = vmatprep.subr.mxu0 0.0
        %1096 = vmatpush2.msra.mxu0 0.0
        %1097 = vmatprep.subr.mxu0 0.0
        %1098 = vmatpush2.msra.mxu0 0.0
        %1099 = vmatprep.subr.mxu0 0.0
        %1100 = vmatpush2.msra.mxu0 0.0
        %1101 = vmatprep.subr.mxu0 0.0
        %1102 = vmatpush2.msra.mxu0 0.0
        %1103 = vmatprep.subr.mxu0 0.0
        %1104 = vmatpush2.msra.mxu0 0.0
        %1105 = vmatprep.subr.mxu0 0.0
        %1106 = vmatpush2.msra.mxu0 0.0
        %1107 = vmatprep.subr.mxu0 0.0
        %1108 = vmatpush2.msra.mxu0 0.0
        %1109 = vmatprep.subr.mxu0 0.0
        %1110 = vmatpush2.msra.mxu0 0.0
        %1111 = vmatprep.subr.mxu0 0.0
        %1112 = vmatpush2.msra.mxu0 0.0
        %1113 = vmatprep.subr.mxu0 0.0
        %1114 = vmatpush2.msra.mxu0 0.0
        %1115 = vmatprep.subr.mxu0 0.0
        %1116 = vmatpush2.msra.mxu0 0.0
        %1117 = vmatprep.subr.mxu0 0.0
        %1118 = vmatpush2.msra.mxu0 0.0
        %1119 = vmatprep.mubr.f32.mxu0 0.0
        %1120 = vmatmul.mubr.f32.gmra.mxu0 %v1053
        %v1121 = vpop.f32.mrf.mxu0
        %v1122 = vadd.f32 0.0, %v1121
        %v1123 = vpop.f32.mrf.mxu0
        %1124 = vdwg.mxu0
        %1126 = vrot.lane.b32.xlu0 %v1122, 32
        %v1127 = vpop.permute.xlu0 %1126
        %v1129 = vsel %vm799, %v956, %v1127
        %v1130 = vld [vmem:[%s7] sm:$0xff]
        %v1131 = vld [vmem:[%s7 + $0x8] sm:$0xff]
        %v1132 = vld [vmem:[%s7 + $0x10] sm:$0xff]
        %v1133 = vld [vmem:[%s7 + $0x18] sm:$0xff]
        %v1134 = vld [vmem:[%s7 + $0x20] sm:$0xff]
        %v1135 = vld [vmem:[%s7 + $0x28] sm:$0xff]
        %v1136 = vld [vmem:[%s7 + $0x30] sm:$0xff]
        %v1137 = vld [vmem:[%s7 + $0x38] sm:$0xff]
        %v1138 = vld [vmem:[%s8] sm:$0x1]
        %v1140 = vlaneseq
        %v1141 = vshrl.u32 %v1140, 7
        %v1142 = vsub.s32 0, %v1141
        %v1143 = vrot.slane %v1138, %v1142
        %v1146 = vsel %vm721, %v1129, 0
        %1148 = vmatprep.subr.mxu0 0.0
        %1149 = vmatpush1.msra.mxu0 0.0
        %1150 = vmatprep.subr.mxu0 0.0
        %1151 = vmatpush1.msra.mxu0 0.0
        %1152 = vmatprep.subr.mxu0 0.0
        %1153 = vmatpush1.msra.mxu0 0.0
        %1154 = vmatprep.subr.mxu0 0.0
        %1155 = vmatpush1.msra.mxu0 0.0
        %1156 = vmatprep.subr.mxu0 0.0
        %1157 = vmatpush1.msra.mxu0 0.0
        %1158 = vmatprep.subr.mxu0 0.0
        %1159 = vmatpush1.msra.mxu0 0.0
        %1160 = vmatprep.subr.mxu0 0.0
        %1161 = vmatpush1.msra.mxu0 0.0
        %1162 = vmatprep.subr.mxu0 0.0
        %1163 = vmatpush1.msra.mxu0 0.0
        %1164 = vmatprep.subr.mxu0 0.0
        %1165 = vmatpush1.msra.mxu0 %v1137
        %1166 = vmatprep.subr.mxu0 0.0
        %1167 = vmatpush1.msra.mxu0 %v1136
        %1168 = vmatprep.subr.mxu0 0.0
        %1169 = vmatpush1.msra.mxu0 %v1135
        %1170 = vmatprep.subr.mxu0 0.0
        %1171 = vmatpush1.msra.mxu0 %v1134
        %1172 = vmatprep.subr.mxu0 0.0
        %1173 = vmatpush1.msra.mxu0 %v1133
        %1174 = vmatprep.subr.mxu0 0.0
        %1175 = vmatpush1.msra.mxu0 %v1132
        %1176 = vmatprep.subr.mxu0 0.0
        %1177 = vmatpush1.msra.mxu0 %v1131
        %1178 = vmatprep.subr.mxu0 0.0
        %1179 = vmatpush1.msra.mxu0 %v1130
        %1180 = vmatprep.subr.mxu0 0.0
        %1181 = vmatpush2.msra.mxu0 0.0
        %1182 = vmatprep.subr.mxu0 0.0
        %1183 = vmatpush2.msra.mxu0 0.0
        %1184 = vmatprep.subr.mxu0 0.0
        %1185 = vmatpush2.msra.mxu0 0.0
        %1186 = vmatprep.subr.mxu0 0.0
        %1187 = vmatpush2.msra.mxu0 0.0
        %1188 = vmatprep.subr.mxu0 0.0
        %1189 = vmatpush2.msra.mxu0 0.0
        %1190 = vmatprep.subr.mxu0 0.0
        %1191 = vmatpush2.msra.mxu0 0.0
        %1192 = vmatprep.subr.mxu0 0.0
        %1193 = vmatpush2.msra.mxu0 0.0
        %1194 = vmatprep.subr.mxu0 0.0
        %1195 = vmatpush2.msra.mxu0 0.0
        %1196 = vmatprep.subr.mxu0 0.0
        %1197 = vmatpush2.msra.mxu0 0.0
        %1198 = vmatprep.subr.mxu0 0.0
        %1199 = vmatpush2.msra.mxu0 0.0
        %1200 = vmatprep.subr.mxu0 0.0
        %1201 = vmatpush2.msra.mxu0 0.0
        %1202 = vmatprep.subr.mxu0 0.0
        %1203 = vmatpush2.msra.mxu0 0.0
        %1204 = vmatprep.subr.mxu0 0.0
        %1205 = vmatpush2.msra.mxu0 0.0
        %1206 = vmatprep.subr.mxu0 0.0
        %1207 = vmatpush2.msra.mxu0 0.0
        %1208 = vmatprep.subr.mxu0 0.0
        %1209 = vmatpush2.msra.mxu0 0.0
        %1210 = vmatprep.subr.mxu0 0.0
        %1211 = vmatpush2.msra.mxu0 0.0
        %1212 = vmatprep.mubr.f32.mxu0 0.0
        %1213 = vmatmul.mubr.f32.gmra.mxu0 %v1146
        %v1214 = vpop.f32.mrf.mxu0
        %v1215 = vadd.f32 %v1143, %v1214
        %v1216 = vpop.f32.mrf.mxu0
        %1217 = vdwg.mxu0
        %v1218 = vadd.f32 %v690, %v1215
        %v1219 = vld [vmem:[#allocation2] sm:$0xff]
        %v1220 = vld [vmem:[#allocation2 + $0x8] sm:$0xff]
        %v1221 = vld [vmem:[#allocation2 + $0x10] sm:$0xff]
        %v1222 = vld [vmem:[#allocation2 + $0x18] sm:$0xff]
        %v1223 = vld [vmem:[#allocation2 + $0x20] sm:$0xff]
        %v1224 = vld [vmem:[#allocation2 + $0x28] sm:$0xff]
        %v1225 = vld [vmem:[#allocation2 + $0x30] sm:$0xff]
        %v1226 = vld [vmem:[#allocation2 + $0x38] sm:$0xff]
        %v1227 = vld [vmem:[%s10] sm:$0x1]
        %v1229 = vlaneseq
        %v1230 = vshrl.u32 %v1229, 7
        %v1231 = vsub.s32 0, %v1230
        %v1232 = vrot.slane %v1227, %v1231
        %v1235 = vsel %vm721, %v1218, 0
        %1237 = vmatprep.subr.mxu0 0.0
        %1238 = vmatpush1.msra.mxu0 0.0
        %1239 = vmatprep.subr.mxu0 0.0
        %1240 = vmatpush1.msra.mxu0 0.0
        %1241 = vmatprep.subr.mxu0 0.0
        %1242 = vmatpush1.msra.mxu0 0.0
        %1243 = vmatprep.subr.mxu0 0.0
        %1244 = vmatpush1.msra.mxu0 0.0
        %1245 = vmatprep.subr.mxu0 0.0
        %1246 = vmatpush1.msra.mxu0 0.0
        %1247 = vmatprep.subr.mxu0 0.0
        %1248 = vmatpush1.msra.mxu0 0.0
        %1249 = vmatprep.subr.mxu0 0.0
        %1250 = vmatpush1.msra.mxu0 0.0
        %1251 = vmatprep.subr.mxu0 0.0
        %1252 = vmatpush1.msra.mxu0 0.0
        %1253 = vmatprep.subr.mxu0 0.0
        %1254 = vmatpush1.msra.mxu0 %v1226
        %1255 = vmatprep.subr.mxu0 0.0
        %1256 = vmatpush1.msra.mxu0 %v1225
        %1257 = vmatprep.subr.mxu0 0.0
        %1258 = vmatpush1.msra.mxu0 %v1224
        %1259 = vmatprep.subr.mxu0 0.0
        %1260 = vmatpush1.msra.mxu0 %v1223
        %1261 = vmatprep.subr.mxu0 0.0
        %1262 = vmatpush1.msra.mxu0 %v1222
        %1263 = vmatprep.subr.mxu0 0.0
        %1264 = vmatpush1.msra.mxu0 %v1221
        %1265 = vmatprep.subr.mxu0 0.0
        %1266 = vmatpush1.msra.mxu0 %v1220
        %1267 = vmatprep.subr.mxu0 0.0
        %1268 = vmatpush1.msra.mxu0 %v1219
        %1269 = vmatprep.subr.mxu0 0.0
        %1270 = vmatpush2.msra.mxu0 0.0
        %1271 = vmatprep.subr.mxu0 0.0
        %1272 = vmatpush2.msra.mxu0 0.0
        %1273 = vmatprep.subr.mxu0 0.0
        %1274 = vmatpush2.msra.mxu0 0.0
        %1275 = vmatprep.subr.mxu0 0.0
        %1276 = vmatpush2.msra.mxu0 0.0
        %1277 = vmatprep.subr.mxu0 0.0
        %1278 = vmatpush2.msra.mxu0 0.0
        %1279 = vmatprep.subr.mxu0 0.0
        %1280 = vmatpush2.msra.mxu0 0.0
        %1281 = vmatprep.subr.mxu0 0.0
        %1282 = vmatpush2.msra.mxu0 0.0
        %1283 = vmatprep.subr.mxu0 0.0
        %1284 = vmatpush2.msra.mxu0 0.0
        %1285 = vmatprep.subr.mxu0 0.0
        %1286 = vmatpush2.msra.mxu0 0.0
        %1287 = vmatprep.subr.mxu0 0.0
        %1288 = vmatpush2.msra.mxu0 0.0
        %1289 = vmatprep.subr.mxu0 0.0
        %1290 = vmatpush2.msra.mxu0 0.0
        %1291 = vmatprep.subr.mxu0 0.0
        %1292 = vmatpush2.msra.mxu0 0.0
        %1293 = vmatprep.subr.mxu0 0.0
        %1294 = vmatpush2.msra.mxu0 0.0
        %1295 = vmatprep.subr.mxu0 0.0
        %1296 = vmatpush2.msra.mxu0 0.0
        %1297 = vmatprep.subr.mxu0 0.0
        %1298 = vmatpush2.msra.mxu0 0.0
        %1299 = vmatprep.subr.mxu0 0.0
        %1300 = vmatpush2.msra.mxu0 0.0
        %1301 = vmatprep.mubr.f32.mxu0 0.0
        %1302 = vmatmul.mubr.f32.gmra.mxu0 %v1235
        %v1303 = vpop.f32.mrf.mxu0
        %v1304 = vadd.f32 %v1232, %v1303
        %v1305 = vpop.f32.mrf.mxu0
        %1306 = vdwg.mxu0
        %v1307 = vmax.f32 %v1304, 0.0
        %v1308 = vld [vmem:[%s11] sm:$0xff]
        %v1309 = vld [vmem:[%s11 + $0x8] sm:$0xff]
        %v1310 = vld [vmem:[%s11 + $0x10] sm:$0xff]
        %v1311 = vld [vmem:[%s11 + $0x18] sm:$0xff]
        %v1312 = vld [vmem:[%s11 + $0x20] sm:$0xff]
        %v1313 = vld [vmem:[%s11 + $0x28] sm:$0xff]
        %v1314 = vld [vmem:[%s11 + $0x30] sm:$0xff]
        %v1315 = vld [vmem:[%s11 + $0x38] sm:$0xff]
        %v1316 = vld [vmem:[%s11 + $0x40] sm:$0xff]
        %v1317 = vld [vmem:[%s11 + $0x48] sm:$0xff]
        %v1318 = vld [vmem:[%s11 + $0x50] sm:$0xff]
        %v1319 = vld [vmem:[%s11 + $0x58] sm:$0xff]
        %v1320 = vld [vmem:[%s11 + $0x60] sm:$0xff]
        %v1321 = vld [vmem:[%s11 + $0x68] sm:$0xff]
        %v1322 = vld [vmem:[%s11 + $0x70] sm:$0xff]
        %v1323 = vld [vmem:[%s11 + $0x78] sm:$0xff]
        %v1324 = vld [vmem:[%s12] sm:$0x1]
        %v1326 = vlaneseq
        %v1327 = vshrl.u32 %v1326, 7
        %v1328 = vsub.s32 0, %v1327
        %v1329 = vrot.slane %v1324, %v1328
        %1331 = vmatprep.subr.mxu0 0.0
        %1332 = vmatpush1.msra.mxu0 %v1323
        %1333 = vmatprep.subr.mxu0 0.0
        %1334 = vmatpush1.msra.mxu0 %v1322
        %1335 = vmatprep.subr.mxu0 0.0
        %1336 = vmatpush1.msra.mxu0 %v1321
        %1337 = vmatprep.subr.mxu0 0.0
        %1338 = vmatpush1.msra.mxu0 %v1320
        %1339 = vmatprep.subr.mxu0 0.0
        %1340 = vmatpush1.msra.mxu0 %v1319
        %1341 = vmatprep.subr.mxu0 0.0
        %1342 = vmatpush1.msra.mxu0 %v1318
        %1343 = vmatprep.subr.mxu0 0.0
        %1344 = vmatpush1.msra.mxu0 %v1317
        %1345 = vmatprep.subr.mxu0 0.0
        %1346 = vmatpush1.msra.mxu0 %v1316
        %1347 = vmatprep.subr.mxu0 0.0
        %1348 = vmatpush1.msra.mxu0 %v1315
        %1349 = vmatprep.subr.mxu0 0.0
        %1350 = vmatpush1.msra.mxu0 %v1314
        %1351 = vmatprep.subr.mxu0 0.0
        %1352 = vmatpush1.msra.mxu0 %v1313
        %1353 = vmatprep.subr.mxu0 0.0
        %1354 = vmatpush1.msra.mxu0 %v1312
        %1355 = vmatprep.subr.mxu0 0.0
        %1356 = vmatpush1.msra.mxu0 %v1311
        %1357 = vmatprep.subr.mxu0 0.0
        %1358 = vmatpush1.msra.mxu0 %v1310
        %1359 = vmatprep.subr.mxu0 0.0
        %1360 = vmatpush1.msra.mxu0 %v1309
        %1361 = vmatprep.subr.mxu0 0.0
        %1362 = vmatpush1.msra.mxu0 %v1308
        %1363 = vmatprep.subr.mxu0 0.0
        %1364 = vmatpush2.msra.mxu0 0.0
        %1365 = vmatprep.subr.mxu0 0.0
        %1366 = vmatpush2.msra.mxu0 0.0
        %1367 = vmatprep.subr.mxu0 0.0
        %1368 = vmatpush2.msra.mxu0 0.0
        %1369 = vmatprep.subr.mxu0 0.0
        %1370 = vmatpush2.msra.mxu0 0.0
        %1371 = vmatprep.subr.mxu0 0.0
        %1372 = vmatpush2.msra.mxu0 0.0
        %1373 = vmatprep.subr.mxu0 0.0
        %1374 = vmatpush2.msra.mxu0 0.0
        %1375 = vmatprep.subr.mxu0 0.0
        %1376 = vmatpush2.msra.mxu0 0.0
        %1377 = vmatprep.subr.mxu0 0.0
        %1378 = vmatpush2.msra.mxu0 0.0
        %1379 = vmatprep.subr.mxu0 0.0
        %1380 = vmatpush2.msra.mxu0 0.0
        %1381 = vmatprep.subr.mxu0 0.0
        %1382 = vmatpush2.msra.mxu0 0.0
        %1383 = vmatprep.subr.mxu0 0.0
        %1384 = vmatpush2.msra.mxu0 0.0
        %1385 = vmatprep.subr.mxu0 0.0
        %1386 = vmatpush2.msra.mxu0 0.0
        %1387 = vmatprep.subr.mxu0 0.0
        %1388 = vmatpush2.msra.mxu0 0.0
        %1389 = vmatprep.subr.mxu0 0.0
        %1390 = vmatpush2.msra.mxu0 0.0
        %1391 = vmatprep.subr.mxu0 0.0
        %1392 = vmatpush2.msra.mxu0 0.0
        %1393 = vmatprep.subr.mxu0 0.0
        %1394 = vmatpush2.msra.mxu0 0.0
        %1395 = vmatprep.mubr.f32.mxu0 0.0
        %1396 = vmatmul.mubr.f32.gmra.mxu0 %v1307
        %v1397 = vpop.f32.mrf.mxu0
        %v1398 = vadd.f32 %v1329, %v1397
        %v1399 = vpop.f32.mrf.mxu0
        %1400 = vdwg.mxu0
        %v1401 = vadd.f32 %v1218, %v1398
        %s1402 = scalar_lea.vmem %s5, 128
        %v1403 = vld [vmem:[%s1402] sm:$0xff]
        %v1404 = vld [vmem:[%s1402 + $0x8] sm:$0xff]
        %v1405 = vld [vmem:[%s1402 + $0x10] sm:$0xff]
        %v1406 = vld [vmem:[%s1402 + $0x18] sm:$0xff]
        %v1407 = vld [vmem:[%s1402 + $0x20] sm:$0xff]
        %v1408 = vld [vmem:[%s1402 + $0x28] sm:$0xff]
        %v1409 = vld [vmem:[%s1402 + $0x30] sm:$0xff]
        %v1410 = vld [vmem:[%s1402 + $0x38] sm:$0xff]
        %v1411 = vld [vmem:[%s1402 + $0x40] sm:$0xff]
        %v1412 = vld [vmem:[%s1402 + $0x48] sm:$0xff]
        %v1413 = vld [vmem:[%s1402 + $0x50] sm:$0xff]
        %v1414 = vld [vmem:[%s1402 + $0x58] sm:$0xff]
        %v1415 = vld [vmem:[%s1402 + $0x60] sm:$0xff]
        %v1416 = vld [vmem:[%s1402 + $0x68] sm:$0xff]
        %v1417 = vld [vmem:[%s1402 + $0x70] sm:$0xff]
        %v1418 = vld [vmem:[%s1402 + $0x78] sm:$0xff]
        %s1419 = scalar_lea.vmem %s6, 2
        %v1420 = vld [vmem:[%s1419] sm:$0x3]
        %v1422 = vlaneseq
        %v1423 = vshrl.u32 %v1422, 7
        %v1424 = vsub.s32 0, %v1423
        %v1425 = vrot.slane %v1420, %v1424
        %v1426 = vlaneseq
        %v1427 = vshrl.u32 %v1426, 7
        %v1428 = vsub.s32 1, %v1427
        %v1429 = vrot.slane %v1420, %v1428
        %v1433 = vsel %vm721, %v1401, 0
        %1435 = vmatprep.subr.mxu0 0.0
        %1436 = vmatpush1.msra.mxu0 0.0
        %1437 = vmatprep.subr.mxu0 0.0
        %1438 = vmatpush1.msra.mxu0 0.0
        %1439 = vmatprep.subr.mxu0 0.0
        %1440 = vmatpush1.msra.mxu0 0.0
        %1441 = vmatprep.subr.mxu0 0.0
        %1442 = vmatpush1.msra.mxu0 0.0
        %1443 = vmatprep.subr.mxu0 0.0
        %1444 = vmatpush1.msra.mxu0 0.0
        %1445 = vmatprep.subr.mxu0 0.0
        %1446 = vmatpush1.msra.mxu0 0.0
        %1447 = vmatprep.subr.mxu0 0.0
        %1448 = vmatpush1.msra.mxu0 0.0
        %1449 = vmatprep.subr.mxu0 0.0
        %1450 = vmatpush1.msra.mxu0 0.0
        %1451 = vmatprep.subr.mxu0 %v1418
        %1452 = vmatpush1.msra.mxu0 %v1417
        %1453 = vmatprep.subr.mxu0 %v1416
        %1454 = vmatpush1.msra.mxu0 %v1415
        %1455 = vmatprep.subr.mxu0 %v1414
        %1456 = vmatpush1.msra.mxu0 %v1413
        %1457 = vmatprep.subr.mxu0 %v1412
        %1458 = vmatpush1.msra.mxu0 %v1411
        %1459 = vmatprep.subr.mxu0 %v1410
        %1460 = vmatpush1.msra.mxu0 %v1409
        %1461 = vmatprep.subr.mxu0 %v1408
        %1462 = vmatpush1.msra.mxu0 %v1407
        %1463 = vmatprep.subr.mxu0 %v1406
        %1464 = vmatpush1.msra.mxu0 %v1405
        %1465 = vmatprep.subr.mxu0 %v1404
        %1466 = vmatpush1.msra.mxu0 %v1403
        %1467 = vmatprep.subr.mxu0 0.0
        %1468 = vmatpush2.msra.mxu0 0.0
        %1469 = vmatprep.subr.mxu0 0.0
        %1470 = vmatpush2.msra.mxu0 0.0
        %1471 = vmatprep.subr.mxu0 0.0
        %1472 = vmatpush2.msra.mxu0 0.0
        %1473 = vmatprep.subr.mxu0 0.0
        %1474 = vmatpush2.msra.mxu0 0.0
        %1475 = vmatprep.subr.mxu0 0.0
        %1476 = vmatpush2.msra.mxu0 0.0
        %1477 = vmatprep.subr.mxu0 0.0
        %1478 = vmatpush2.msra.mxu0 0.0
        %1479 = vmatprep.subr.mxu0 0.0
        %1480 = vmatpush2.msra.mxu0 0.0
        %1481 = vmatprep.subr.mxu0 0.0
        %1482 = vmatpush2.msra.mxu0 0.0
        %1483 = vmatprep.subr.mxu0 0.0
        %1484 = vmatpush2.msra.mxu0 0.0
        %1485 = vmatprep.subr.mxu0 0.0
        %1486 = vmatpush2.msra.mxu0 0.0
        %1487 = vmatprep.subr.mxu0 0.0
        %1488 = vmatpush2.msra.mxu0 0.0
        %1489 = vmatprep.subr.mxu0 0.0
        %1490 = vmatpush2.msra.mxu0 0.0
        %1491 = vmatprep.subr.mxu0 0.0
        %1492 = vmatpush2.msra.mxu0 0.0
        %1493 = vmatprep.subr.mxu0 0.0
        %1494 = vmatpush2.msra.mxu0 0.0
        %1495 = vmatprep.subr.mxu0 0.0
        %1496 = vmatpush2.msra.mxu0 0.0
        %1497 = vmatprep.subr.mxu0 0.0
        %1498 = vmatpush2.msra.mxu0 0.0
        %1499 = vmatprep.mubr.f32.mxu0 0.0
        %1500 = vmatmul.mubr.f32.gmra.mxu0 %v1433
        %v1501 = vpop.f32.mrf.mxu0
        %v1502 = vadd.f32 %v1425, %v1501
        %v1503 = vpop.f32.mrf.mxu0
        %v1504 = vadd.f32 %v1429, %v1503
        %1505 = vdwg.mxu0
        %1507 = vrot.lane.b32.xlu0 %v1502, 64
        %v1508 = vpop.permute.xlu0 %1507
        %v1509 = vsel %vm799, %v1502, 0
        %v1511 = vsel %vm799, %v1508, 0
        %1513 = vmatprep.subr.mxu0 0.0
        %1514 = vmatpush1.xpose.msra.mxu0 0.0
        %1515 = vmatprep.subr.mxu0 0.0
        %1516 = vmatpush1.xpose.msra.mxu0 0.0
        %1517 = vmatprep.subr.mxu0 0.0
        %1518 = vmatpush1.xpose.msra.mxu0 0.0
        %1519 = vmatprep.subr.mxu0 0.0
        %1520 = vmatpush1.xpose.msra.mxu0 0.0
        %1521 = vmatprep.subr.mxu0 0.0
        %1522 = vmatpush1.xpose.msra.mxu0 0.0
        %1523 = vmatprep.subr.mxu0 0.0
        %1524 = vmatpush1.xpose.msra.mxu0 0.0
        %1525 = vmatprep.subr.mxu0 0.0
        %1526 = vmatpush1.xpose.msra.mxu0 0.0
        %1527 = vmatprep.subr.mxu0 0.0
        %1528 = vmatpush1.xpose.msra.mxu0 0.0
        %1529 = vmatprep.subr.mxu0 0.0
        %1530 = vmatpush1.xpose.msra.mxu0 0.0
        %1531 = vmatprep.subr.mxu0 0.0
        %1532 = vmatpush1.xpose.msra.mxu0 0.0
        %1533 = vmatprep.subr.mxu0 0.0
        %1534 = vmatpush1.xpose.msra.mxu0 0.0
        %1535 = vmatprep.subr.mxu0 0.0
        %1536 = vmatpush1.xpose.msra.mxu0 0.0
        %1537 = vmatprep.subr.mxu0 0.0
        %1538 = vmatpush1.xpose.msra.mxu0 0.0
        %1539 = vmatprep.subr.mxu0 0.0
        %1540 = vmatpush1.xpose.msra.mxu0 0.0
        %1541 = vmatprep.subr.mxu0 0.0
        %1542 = vmatpush1.xpose.msra.mxu0 0.0
        %1543 = vmatprep.subr.mxu0 0.0
        %1544 = vmatpush1.xpose.msra.mxu0 %v1511
        %1545 = vmatprep.subr.mxu0 0.0
        %1546 = vmatpush2.xpose.msra.mxu0 0.0
        %1547 = vmatprep.subr.mxu0 0.0
        %1548 = vmatpush2.xpose.msra.mxu0 0.0
        %1549 = vmatprep.subr.mxu0 0.0
        %1550 = vmatpush2.xpose.msra.mxu0 0.0
        %1551 = vmatprep.subr.mxu0 0.0
        %1552 = vmatpush2.xpose.msra.mxu0 0.0
        %1553 = vmatprep.subr.mxu0 0.0
        %1554 = vmatpush2.xpose.msra.mxu0 0.0
        %1555 = vmatprep.subr.mxu0 0.0
        %1556 = vmatpush2.xpose.msra.mxu0 0.0
        %1557 = vmatprep.subr.mxu0 0.0
        %1558 = vmatpush2.xpose.msra.mxu0 0.0
        %1559 = vmatprep.subr.mxu0 0.0
        %1560 = vmatpush2.xpose.msra.mxu0 0.0
        %1561 = vmatprep.subr.mxu0 0.0
        %1562 = vmatpush2.xpose.msra.mxu0 0.0
        %1563 = vmatprep.subr.mxu0 0.0
        %1564 = vmatpush2.xpose.msra.mxu0 0.0
        %1565 = vmatprep.subr.mxu0 0.0
        %1566 = vmatpush2.xpose.msra.mxu0 0.0
        %1567 = vmatprep.subr.mxu0 0.0
        %1568 = vmatpush2.xpose.msra.mxu0 0.0
        %1569 = vmatprep.subr.mxu0 0.0
        %1570 = vmatpush2.xpose.msra.mxu0 0.0
        %1571 = vmatprep.subr.mxu0 0.0
        %1572 = vmatpush2.xpose.msra.mxu0 0.0
        %1573 = vmatprep.subr.mxu0 0.0
        %1574 = vmatpush2.xpose.msra.mxu0 0.0
        %1575 = vmatprep.subr.mxu0 0.0
        %1576 = vmatpush2.xpose.msra.mxu0 0.0
        %1577 = vmatprep.mubr.f32.mxu0 0.0
        %1578 = vmatmul.mubr.f32.gmra.mxu0 %v1509
        %v1579 = vpop.f32.mrf.mxu0
        %v1580 = vadd.f32 0.0, %v1579
        %v1581 = vpop.f32.mrf.mxu0
        %1582 = vdwg.mxu0
        %v1583 = vsel %vm874, %v1580, -inf
        %1584 = vmax.xlane.f32.xlu0 %v1583
        %v1585 = vpop.xlane.xlu0 %1584
        %v1586 = vsub.f32 %v1580, %v1585
        %v1587 = vmul.f32 %v1586, 1.442695
        %v1588 = vpow.pop %v1587
        %v1589 = vsel %vm874, %v1588, 0.0
        %1590 = vadd.xlane.f32.xlu0 %v1589
        %v1591 = vpop.xlane.xlu0 %1590
        %v1592 = vrcp.pop %v1591
        %v1593 = vmul.f32 %v1588, %v1592
        %v1595 = vsel %vm874, %v1593, 0
        %1597 = vmatprep.subr.mxu0 0.0
        %1598 = vmatpush1.msra.mxu0 0.0
        %1599 = vmatprep.subr.mxu0 0.0
        %1600 = vmatpush1.msra.mxu0 0.0
        %1601 = vmatprep.subr.mxu0 0.0
        %1602 = vmatpush1.msra.mxu0 0.0
        %1603 = vmatprep.subr.mxu0 0.0
        %1604 = vmatpush1.msra.mxu0 0.0
        %1605 = vmatprep.subr.mxu0 0.0
        %1606 = vmatpush1.msra.mxu0 0.0
        %1607 = vmatprep.subr.mxu0 0.0
        %1608 = vmatpush1.msra.mxu0 0.0
        %1609 = vmatprep.subr.mxu0 0.0
        %1610 = vmatpush1.msra.mxu0 0.0
        %1611 = vmatprep.subr.mxu0 0.0
        %1612 = vmatpush1.msra.mxu0 0.0
        %1613 = vmatprep.subr.mxu0 0.0
        %1614 = vmatpush1.msra.mxu0 0.0
        %1615 = vmatprep.subr.mxu0 0.0
        %1616 = vmatpush1.msra.mxu0 0.0
        %1617 = vmatprep.subr.mxu0 0.0
        %1618 = vmatpush1.msra.mxu0 0.0
        %1619 = vmatprep.subr.mxu0 0.0
        %1620 = vmatpush1.msra.mxu0 0.0
        %1621 = vmatprep.subr.mxu0 0.0
        %1622 = vmatpush1.msra.mxu0 0.0
        %1623 = vmatprep.subr.mxu0 0.0
        %1624 = vmatpush1.msra.mxu0 0.0
        %1625 = vmatprep.subr.mxu0 0.0
        %1626 = vmatpush1.msra.mxu0 0.0
        %1627 = vmatprep.subr.mxu0 0.0
        %1628 = vmatpush1.msra.mxu0 %v1504
        %1629 = vmatprep.subr.mxu0 0.0
        %1630 = vmatpush2.msra.mxu0 0.0
        %1631 = vmatprep.subr.mxu0 0.0
        %1632 = vmatpush2.msra.mxu0 0.0
        %1633 = vmatprep.subr.mxu0 0.0
        %1634 = vmatpush2.msra.mxu0 0.0
        %1635 = vmatprep.subr.mxu0 0.0
        %1636 = vmatpush2.msra.mxu0 0.0
        %1637 = vmatprep.subr.mxu0 0.0
        %1638 = vmatpush2.msra.mxu0 0.0
        %1639 = vmatprep.subr.mxu0 0.0
        %1640 = vmatpush2.msra.mxu0 0.0
        %1641 = vmatprep.subr.mxu0 0.0
        %1642 = vmatpush2.msra.mxu0 0.0
        %1643 = vmatprep.subr.mxu0 0.0
        %1644 = vmatpush2.msra.mxu0 0.0
        %1645 = vmatprep.subr.mxu0 0.0
        %1646 = vmatpush2.msra.mxu0 0.0
        %1647 = vmatprep.subr.mxu0 0.0
        %1648 = vmatpush2.msra.mxu0 0.0
        %1649 = vmatprep.subr.mxu0 0.0
        %1650 = vmatpush2.msra.mxu0 0.0
        %1651 = vmatprep.subr.mxu0 0.0
        %1652 = vmatpush2.msra.mxu0 0.0
        %1653 = vmatprep.subr.mxu0 0.0
        %1654 = vmatpush2.msra.mxu0 0.0
        %1655 = vmatprep.subr.mxu0 0.0
        %1656 = vmatpush2.msra.mxu0 0.0
        %1657 = vmatprep.subr.mxu0 0.0
        %1658 = vmatpush2.msra.mxu0 0.0
        %1659 = vmatprep.subr.mxu0 0.0
        %1660 = vmatpush2.msra.mxu0 0.0
        %1661 = vmatprep.mubr.f32.mxu0 0.0
        %1662 = vmatmul.mubr.f32.gmra.mxu0 %v1595
        %v1663 = vpop.f32.mrf.mxu0
        %v1664 = vadd.f32 0.0, %v1663
        %v1665 = vpop.f32.mrf.mxu0
        %1666 = vdwg.mxu0
        %1667 = vrot.lane.b32.xlu0 %v1502, 96
        %v1668 = vpop.permute.xlu0 %1667
        %1669 = vrot.lane.b32.xlu0 %v1502, 32
        %v1670 = vpop.permute.xlu0 %1669
        %v1671 = vsel %vm799, %v1668, 0
        %v1673 = vsel %vm799, %v1670, 0
        %1675 = vmatprep.subr.mxu0 0.0
        %1676 = vmatpush1.xpose.msra.mxu0 0.0
        %1677 = vmatprep.subr.mxu0 0.0
        %1678 = vmatpush1.xpose.msra.mxu0 0.0
        %1679 = vmatprep.subr.mxu0 0.0
        %1680 = vmatpush1.xpose.msra.mxu0 0.0
        %1681 = vmatprep.subr.mxu0 0.0
        %1682 = vmatpush1.xpose.msra.mxu0 0.0
        %1683 = vmatprep.subr.mxu0 0.0
        %1684 = vmatpush1.xpose.msra.mxu0 0.0
        %1685 = vmatprep.subr.mxu0 0.0
        %1686 = vmatpush1.xpose.msra.mxu0 0.0
        %1687 = vmatprep.subr.mxu0 0.0
        %1688 = vmatpush1.xpose.msra.mxu0 0.0
        %1689 = vmatprep.subr.mxu0 0.0
        %1690 = vmatpush1.xpose.msra.mxu0 0.0
        %1691 = vmatprep.subr.mxu0 0.0
        %1692 = vmatpush1.xpose.msra.mxu0 0.0
        %1693 = vmatprep.subr.mxu0 0.0
        %1694 = vmatpush1.xpose.msra.mxu0 0.0
        %1695 = vmatprep.subr.mxu0 0.0
        %1696 = vmatpush1.xpose.msra.mxu0 0.0
        %1697 = vmatprep.subr.mxu0 0.0
        %1698 = vmatpush1.xpose.msra.mxu0 0.0
        %1699 = vmatprep.subr.mxu0 0.0
        %1700 = vmatpush1.xpose.msra.mxu0 0.0
        %1701 = vmatprep.subr.mxu0 0.0
        %1702 = vmatpush1.xpose.msra.mxu0 0.0
        %1703 = vmatprep.subr.mxu0 0.0
        %1704 = vmatpush1.xpose.msra.mxu0 0.0
        %1705 = vmatprep.subr.mxu0 0.0
        %1706 = vmatpush1.xpose.msra.mxu0 %v1673
        %1707 = vmatprep.subr.mxu0 0.0
        %1708 = vmatpush2.xpose.msra.mxu0 0.0
        %1709 = vmatprep.subr.mxu0 0.0
        %1710 = vmatpush2.xpose.msra.mxu0 0.0
        %1711 = vmatprep.subr.mxu0 0.0
        %1712 = vmatpush2.xpose.msra.mxu0 0.0
        %1713 = vmatprep.subr.mxu0 0.0
        %1714 = vmatpush2.xpose.msra.mxu0 0.0
        %1715 = vmatprep.subr.mxu0 0.0
        %1716 = vmatpush2.xpose.msra.mxu0 0.0
        %1717 = vmatprep.subr.mxu0 0.0
        %1718 = vmatpush2.xpose.msra.mxu0 0.0
        %1719 = vmatprep.subr.mxu0 0.0
        %1720 = vmatpush2.xpose.msra.mxu0 0.0
        %1721 = vmatprep.subr.mxu0 0.0
        %1722 = vmatpush2.xpose.msra.mxu0 0.0
        %1723 = vmatprep.subr.mxu0 0.0
        %1724 = vmatpush2.xpose.msra.mxu0 0.0
        %1725 = vmatprep.subr.mxu0 0.0
        %1726 = vmatpush2.xpose.msra.mxu0 0.0
        %1727 = vmatprep.subr.mxu0 0.0
        %1728 = vmatpush2.xpose.msra.mxu0 0.0
        %1729 = vmatprep.subr.mxu0 0.0
        %1730 = vmatpush2.xpose.msra.mxu0 0.0
        %1731 = vmatprep.subr.mxu0 0.0
        %1732 = vmatpush2.xpose.msra.mxu0 0.0
        %1733 = vmatprep.subr.mxu0 0.0
        %1734 = vmatpush2.xpose.msra.mxu0 0.0
        %1735 = vmatprep.subr.mxu0 0.0
        %1736 = vmatpush2.xpose.msra.mxu0 0.0
        %1737 = vmatprep.subr.mxu0 0.0
        %1738 = vmatpush2.xpose.msra.mxu0 0.0
        %1739 = vmatprep.mubr.f32.mxu0 0.0
        %1740 = vmatmul.mubr.f32.gmra.mxu0 %v1671
        %v1741 = vpop.f32.mrf.mxu0
        %v1742 = vadd.f32 0.0, %v1741
        %v1743 = vpop.f32.mrf.mxu0
        %1744 = vdwg.mxu0
        %v1745 = vsel %vm874, %v1742, -inf
        %1746 = vmax.xlane.f32.xlu0 %v1745
        %v1747 = vpop.xlane.xlu0 %1746
        %v1748 = vsub.f32 %v1742, %v1747
        %v1749 = vmul.f32 %v1748, 1.442695
        %v1750 = vpow.pop %v1749
        %v1751 = vsel %vm874, %v1750, 0.0
        %1752 = vadd.xlane.f32.xlu0 %v1751
        %v1753 = vpop.xlane.xlu0 %1752
        %v1754 = vrcp.pop %v1753
        %v1755 = vmul.f32 %v1750, %v1754
        %1757 = vrot.lane.b32.xlu0 %v1504, 96
        %v1758 = vpop.permute.xlu0 %1757
        %v1761 = vsel %vm874, %v1755, 0
        %1763 = vmatprep.subr.mxu0 0.0
        %1764 = vmatpush1.msra.mxu0 0.0
        %1765 = vmatprep.subr.mxu0 0.0
        %1766 = vmatpush1.msra.mxu0 0.0
        %1767 = vmatprep.subr.mxu0 0.0
        %1768 = vmatpush1.msra.mxu0 0.0
        %1769 = vmatprep.subr.mxu0 0.0
        %1770 = vmatpush1.msra.mxu0 0.0
        %1771 = vmatprep.subr.mxu0 0.0
        %1772 = vmatpush1.msra.mxu0 0.0
        %1773 = vmatprep.subr.mxu0 0.0
        %1774 = vmatpush1.msra.mxu0 0.0
        %1775 = vmatprep.subr.mxu0 0.0
        %1776 = vmatpush1.msra.mxu0 0.0
        %1777 = vmatprep.subr.mxu0 0.0
        %1778 = vmatpush1.msra.mxu0 0.0
        %1779 = vmatprep.subr.mxu0 0.0
        %1780 = vmatpush1.msra.mxu0 0.0
        %1781 = vmatprep.subr.mxu0 0.0
        %1782 = vmatpush1.msra.mxu0 0.0
        %1783 = vmatprep.subr.mxu0 0.0
        %1784 = vmatpush1.msra.mxu0 0.0
        %1785 = vmatprep.subr.mxu0 0.0
        %1786 = vmatpush1.msra.mxu0 0.0
        %1787 = vmatprep.subr.mxu0 0.0
        %1788 = vmatpush1.msra.mxu0 0.0
        %1789 = vmatprep.subr.mxu0 0.0
        %1790 = vmatpush1.msra.mxu0 0.0
        %1791 = vmatprep.subr.mxu0 0.0
        %1792 = vmatpush1.msra.mxu0 0.0
        %1793 = vmatprep.subr.mxu0 0.0
        %1794 = vmatpush1.msra.mxu0 %v1758
        %1795 = vmatprep.subr.mxu0 0.0
        %1796 = vmatpush2.msra.mxu0 0.0
        %1797 = vmatprep.subr.mxu0 0.0
        %1798 = vmatpush2.msra.mxu0 0.0
        %1799 = vmatprep.subr.mxu0 0.0
        %1800 = vmatpush2.msra.mxu0 0.0
        %1801 = vmatprep.subr.mxu0 0.0
        %1802 = vmatpush2.msra.mxu0 0.0
        %1803 = vmatprep.subr.mxu0 0.0
        %1804 = vmatpush2.msra.mxu0 0.0
        %1805 = vmatprep.subr.mxu0 0.0
        %1806 = vmatpush2.msra.mxu0 0.0
        %1807 = vmatprep.subr.mxu0 0.0
        %1808 = vmatpush2.msra.mxu0 0.0
        %1809 = vmatprep.subr.mxu0 0.0
        %1810 = vmatpush2.msra.mxu0 0.0
        %1811 = vmatprep.subr.mxu0 0.0
        %1812 = vmatpush2.msra.mxu0 0.0
        %1813 = vmatprep.subr.mxu0 0.0
        %1814 = vmatpush2.msra.mxu0 0.0
        %1815 = vmatprep.subr.mxu0 0.0
        %1816 = vmatpush2.msra.mxu0 0.0
        %1817 = vmatprep.subr.mxu0 0.0
        %1818 = vmatpush2.msra.mxu0 0.0
        %1819 = vmatprep.subr.mxu0 0.0
        %1820 = vmatpush2.msra.mxu0 0.0
        %1821 = vmatprep.subr.mxu0 0.0
        %1822 = vmatpush2.msra.mxu0 0.0
        %1823 = vmatprep.subr.mxu0 0.0
        %1824 = vmatpush2.msra.mxu0 0.0
        %1825 = vmatprep.subr.mxu0 0.0
        %1826 = vmatpush2.msra.mxu0 0.0
        %1827 = vmatprep.mubr.f32.mxu0 0.0
        %1828 = vmatmul.mubr.f32.gmra.mxu0 %v1761
        %v1829 = vpop.f32.mrf.mxu0
        %v1830 = vadd.f32 0.0, %v1829
        %v1831 = vpop.f32.mrf.mxu0
        %1832 = vdwg.mxu0
        %1834 = vrot.lane.b32.xlu0 %v1830, 32
        %v1835 = vpop.permute.xlu0 %1834
        %v1837 = vsel %vm799, %v1664, %v1835
        %s1838 = scalar_lea.vmem %s7, 64
        %v1839 = vld [vmem:[%s1838] sm:$0xff]
        %v1840 = vld [vmem:[%s1838 + $0x8] sm:$0xff]
        %v1841 = vld [vmem:[%s1838 + $0x10] sm:$0xff]
        %v1842 = vld [vmem:[%s1838 + $0x18] sm:$0xff]
        %v1843 = vld [vmem:[%s1838 + $0x20] sm:$0xff]
        %v1844 = vld [vmem:[%s1838 + $0x28] sm:$0xff]
        %v1845 = vld [vmem:[%s1838 + $0x30] sm:$0xff]
        %v1846 = vld [vmem:[%s1838 + $0x38] sm:$0xff]
        %s1847 = scalar_lea.vmem %s8, 1
        %v1848 = vld [vmem:[%s1847] sm:$0x1]
        %v1850 = vlaneseq
        %v1851 = vshrl.u32 %v1850, 7
        %v1852 = vsub.s32 0, %v1851
        %v1853 = vrot.slane %v1848, %v1852
        %v1856 = vsel %vm721, %v1837, 0
        %1858 = vmatprep.subr.mxu0 0.0
        %1859 = vmatpush1.msra.mxu0 0.0
        %1860 = vmatprep.subr.mxu0 0.0
        %1861 = vmatpush1.msra.mxu0 0.0
        %1862 = vmatprep.subr.mxu0 0.0
        %1863 = vmatpush1.msra.mxu0 0.0
        %1864 = vmatprep.subr.mxu0 0.0
        %1865 = vmatpush1.msra.mxu0 0.0
        %1866 = vmatprep.subr.mxu0 0.0
        %1867 = vmatpush1.msra.mxu0 0.0
        %1868 = vmatprep.subr.mxu0 0.0
        %1869 = vmatpush1.msra.mxu0 0.0
        %1870 = vmatprep.subr.mxu0 0.0
        %1871 = vmatpush1.msra.mxu0 0.0
        %1872 = vmatprep.subr.mxu0 0.0
        %1873 = vmatpush1.msra.mxu0 0.0
        %1874 = vmatprep.subr.mxu0 0.0
        %1875 = vmatpush1.msra.mxu0 %v1846
        %1876 = vmatprep.subr.mxu0 0.0
        %1877 = vmatpush1.msra.mxu0 %v1845
        %1878 = vmatprep.subr.mxu0 0.0
        %1879 = vmatpush1.msra.mxu0 %v1844
        %1880 = vmatprep.subr.mxu0 0.0
        %1881 = vmatpush1.msra.mxu0 %v1843
        %1882 = vmatprep.subr.mxu0 0.0
        %1883 = vmatpush1.msra.mxu0 %v1842
        %1884 = vmatprep.subr.mxu0 0.0
        %1885 = vmatpush1.msra.mxu0 %v1841
        %1886 = vmatprep.subr.mxu0 0.0
        %1887 = vmatpush1.msra.mxu0 %v1840
        %1888 = vmatprep.subr.mxu0 0.0
        %1889 = vmatpush1.msra.mxu0 %v1839
        %1890 = vmatprep.subr.mxu0 0.0
        %1891 = vmatpush2.msra.mxu0 0.0
        %1892 = vmatprep.subr.mxu0 0.0
        %1893 = vmatpush2.msra.mxu0 0.0
        %1894 = vmatprep.subr.mxu0 0.0
        %1895 = vmatpush2.msra.mxu0 0.0
        %1896 = vmatprep.subr.mxu0 0.0
        %1897 = vmatpush2.msra.mxu0 0.0
        %1898 = vmatprep.subr.mxu0 0.0
        %1899 = vmatpush2.msra.mxu0 0.0
        %1900 = vmatprep.subr.mxu0 0.0
        %1901 = vmatpush2.msra.mxu0 0.0
        %1902 = vmatprep.subr.mxu0 0.0
        %1903 = vmatpush2.msra.mxu0 0.0
        %1904 = vmatprep.subr.mxu0 0.0
        %1905 = vmatpush2.msra.mxu0 0.0
        %1906 = vmatprep.subr.mxu0 0.0
        %1907 = vmatpush2.msra.mxu0 0.0
        %1908 = vmatprep.subr.mxu0 0.0
        %1909 = vmatpush2.msra.mxu0 0.0
        %1910 = vmatprep.subr.mxu0 0.0
        %1911 = vmatpush2.msra.mxu0 0.0
        %1912 = vmatprep.subr.mxu0 0.0
        %1913 = vmatpush2.msra.mxu0 0.0
        %1914 = vmatprep.subr.mxu0 0.0
        %1915 = vmatpush2.msra.mxu0 0.0
        %1916 = vmatprep.subr.mxu0 0.0
        %1917 = vmatpush2.msra.mxu0 0.0
        %1918 = vmatprep.subr.mxu0 0.0
        %1919 = vmatpush2.msra.mxu0 0.0
        %1920 = vmatprep.subr.mxu0 0.0
        %1921 = vmatpush2.msra.mxu0 0.0
        %1922 = vmatprep.mubr.f32.mxu0 0.0
        %1923 = vmatmul.mubr.f32.gmra.mxu0 %v1856
        %v1924 = vpop.f32.mrf.mxu0
        %v1925 = vadd.f32 %v1853, %v1924
        %v1926 = vpop.f32.mrf.mxu0
        %1927 = vdwg.mxu0
        %v1928 = vadd.f32 %v1401, %v1925
        %s1929 = scalar_lea.vmem [#allocation2], 64
        %v1930 = vld [vmem:[%s1929] sm:$0xff]
        %v1931 = vld [vmem:[%s1929 + $0x8] sm:$0xff]
        %v1932 = vld [vmem:[%s1929 + $0x10] sm:$0xff]
        %v1933 = vld [vmem:[%s1929 + $0x18] sm:$0xff]
        %v1934 = vld [vmem:[%s1929 + $0x20] sm:$0xff]
        %v1935 = vld [vmem:[%s1929 + $0x28] sm:$0xff]
        %v1936 = vld [vmem:[%s1929 + $0x30] sm:$0xff]
        %v1937 = vld [vmem:[%s1929 + $0x38] sm:$0xff]
        %s1938 = scalar_lea.vmem %s10, 1
        %v1939 = vld [vmem:[%s1938] sm:$0x1]
        %v1941 = vlaneseq
        %v1942 = vshrl.u32 %v1941, 7
        %v1943 = vsub.s32 0, %v1942
        %v1944 = vrot.slane %v1939, %v1943
        %v1947 = vsel %vm721, %v1928, 0
        %1949 = vmatprep.subr.mxu0 0.0
        %1950 = vmatpush1.msra.mxu0 0.0
        %1951 = vmatprep.subr.mxu0 0.0
        %1952 = vmatpush1.msra.mxu0 0.0
        %1953 = vmatprep.subr.mxu0 0.0
        %1954 = vmatpush1.msra.mxu0 0.0
        %1955 = vmatprep.subr.mxu0 0.0
        %1956 = vmatpush1.msra.mxu0 0.0
        %1957 = vmatprep.subr.mxu0 0.0
        %1958 = vmatpush1.msra.mxu0 0.0
        %1959 = vmatprep.subr.mxu0 0.0
        %1960 = vmatpush1.msra.mxu0 0.0
        %1961 = vmatprep.subr.mxu0 0.0
        %1962 = vmatpush1.msra.mxu0 0.0
        %1963 = vmatprep.subr.mxu0 0.0
        %1964 = vmatpush1.msra.mxu0 0.0
        %1965 = vmatprep.subr.mxu0 0.0
        %1966 = vmatpush1.msra.mxu0 %v1937
        %1967 = vmatprep.subr.mxu0 0.0
        %1968 = vmatpush1.msra.mxu0 %v1936
        %1969 = vmatprep.subr.mxu0 0.0
        %1970 = vmatpush1.msra.mxu0 %v1935
        %1971 = vmatprep.subr.mxu0 0.0
        %1972 = vmatpush1.msra.mxu0 %v1934
        %1973 = vmatprep.subr.mxu0 0.0
        %1974 = vmatpush1.msra.mxu0 %v1933
        %1975 = vmatprep.subr.mxu0 0.0
        %1976 = vmatpush1.msra.mxu0 %v1932
        %1977 = vmatprep.subr.mxu0 0.0
        %1978 = vmatpush1.msra.mxu0 %v1931
        %1979 = vmatprep.subr.mxu0 0.0
        %1980 = vmatpush1.msra.mxu0 %v1930
        %1981 = vmatprep.subr.mxu0 0.0
        %1982 = vmatpush2.msra.mxu0 0.0
        %1983 = vmatprep.subr.mxu0 0.0
        %1984 = vmatpush2.msra.mxu0 0.0
        %1985 = vmatprep.subr.mxu0 0.0
        %1986 = vmatpush2.msra.mxu0 0.0
        %1987 = vmatprep.subr.mxu0 0.0
        %1988 = vmatpush2.msra.mxu0 0.0
        %1989 = vmatprep.subr.mxu0 0.0
        %1990 = vmatpush2.msra.mxu0 0.0
        %1991 = vmatprep.subr.mxu0 0.0
        %1992 = vmatpush2.msra.mxu0 0.0
        %1993 = vmatprep.subr.mxu0 0.0
        %1994 = vmatpush2.msra.mxu0 0.0
        %1995 = vmatprep.subr.mxu0 0.0
        %1996 = vmatpush2.msra.mxu0 0.0
        %1997 = vmatprep.subr.mxu0 0.0
        %1998 = vmatpush2.msra.mxu0 0.0
        %1999 = vmatprep.subr.mxu0 0.0
        %2000 = vmatpush2.msra.mxu0 0.0
        %2001 = vmatprep.subr.mxu0 0.0
        %2002 = vmatpush2.msra.mxu0 0.0
        %2003 = vmatprep.subr.mxu0 0.0
        %2004 = vmatpush2.msra.mxu0 0.0
        %2005 = vmatprep.subr.mxu0 0.0
        %2006 = vmatpush2.msra.mxu0 0.0
        %2007 = vmatprep.subr.mxu0 0.0
        %2008 = vmatpush2.msra.mxu0 0.0
        %2009 = vmatprep.subr.mxu0 0.0
        %2010 = vmatpush2.msra.mxu0 0.0
        %2011 = vmatprep.subr.mxu0 0.0
        %2012 = vmatpush2.msra.mxu0 0.0
        %2013 = vmatprep.mubr.f32.mxu0 0.0
        %2014 = vmatmul.mubr.f32.gmra.mxu0 %v1947
        %v2015 = vpop.f32.mrf.mxu0
        %v2016 = vadd.f32 %v1944, %v2015
        %v2017 = vpop.f32.mrf.mxu0
        %2018 = vdwg.mxu0
        %v2019 = vmax.f32 %v2016, 0.0
        %s2020 = scalar_lea.vmem %s11, 128
        %v2021 = vld [vmem:[%s2020] sm:$0xff]
        %v2022 = vld [vmem:[%s2020 + $0x8] sm:$0xff]
        %v2023 = vld [vmem:[%s2020 + $0x10] sm:$0xff]
        %v2024 = vld [vmem:[%s2020 + $0x18] sm:$0xff]
        %v2025 = vld [vmem:[%s2020 + $0x20] sm:$0xff]
        %v2026 = vld [vmem:[%s2020 + $0x28] sm:$0xff]
        %v2027 = vld [vmem:[%s2020 + $0x30] sm:$0xff]
        %v2028 = vld [vmem:[%s2020 + $0x38] sm:$0xff]
        %v2029 = vld [vmem:[%s2020 + $0x40] sm:$0xff]
        %v2030 = vld [vmem:[%s2020 + $0x48] sm:$0xff]
        %v2031 = vld [vmem:[%s2020 + $0x50] sm:$0xff]
        %v2032 = vld [vmem:[%s2020 + $0x58] sm:$0xff]
        %v2033 = vld [vmem:[%s2020 + $0x60] sm:$0xff]
        %v2034 = vld [vmem:[%s2020 + $0x68] sm:$0xff]
        %v2035 = vld [vmem:[%s2020 + $0x70] sm:$0xff]
        %v2036 = vld [vmem:[%s2020 + $0x78] sm:$0xff]
        %s2037 = scalar_lea.vmem %s12, 1
        %v2038 = vld [vmem:[%s2037] sm:$0x1]
        %v2040 = vlaneseq
        %v2041 = vshrl.u32 %v2040, 7
        %v2042 = vsub.s32 0, %v2041
        %v2043 = vrot.slane %v2038, %v2042
        %2045 = vmatprep.subr.mxu0 0.0
        %2046 = vmatpush1.msra.mxu0 %v2036
        %2047 = vmatprep.subr.mxu0 0.0
        %2048 = vmatpush1.msra.mxu0 %v2035
        %2049 = vmatprep.subr.mxu0 0.0
        %2050 = vmatpush1.msra.mxu0 %v2034
        %2051 = vmatprep.subr.mxu0 0.0
        %2052 = vmatpush1.msra.mxu0 %v2033
        %2053 = vmatprep.subr.mxu0 0.0
        %2054 = vmatpush1.msra.mxu0 %v2032
        %2055 = vmatprep.subr.mxu0 0.0
        %2056 = vmatpush1.msra.mxu0 %v2031
        %2057 = vmatprep.subr.mxu0 0.0
        %2058 = vmatpush1.msra.mxu0 %v2030
        %2059 = vmatprep.subr.mxu0 0.0
        %2060 = vmatpush1.msra.mxu0 %v2029
        %2061 = vmatprep.subr.mxu0 0.0
        %2062 = vmatpush1.msra.mxu0 %v2028
        %2063 = vmatprep.subr.mxu0 0.0
        %2064 = vmatpush1.msra.mxu0 %v2027
        %2065 = vmatprep.subr.mxu0 0.0
        %2066 = vmatpush1.msra.mxu0 %v2026
        %2067 = vmatprep.subr.mxu0 0.0
        %2068 = vmatpush1.msra.mxu0 %v2025
        %2069 = vmatprep.subr.mxu0 0.0
        %2070 = vmatpush1.msra.mxu0 %v2024
        %2071 = vmatprep.subr.mxu0 0.0
        %2072 = vmatpush1.msra.mxu0 %v2023
        %2073 = vmatprep.subr.mxu0 0.0
        %2074 = vmatpush1.msra.mxu0 %v2022
        %2075 = vmatprep.subr.mxu0 0.0
        %2076 = vmatpush1.msra.mxu0 %v2021
        %2077 = vmatprep.subr.mxu0 0.0
        %2078 = vmatpush2.msra.mxu0 0.0
        %2079 = vmatprep.subr.mxu0 0.0
        %2080 = vmatpush2.msra.mxu0 0.0
        %2081 = vmatprep.subr.mxu0 0.0
        %2082 = vmatpush2.msra.mxu0 0.0
        %2083 = vmatprep.subr.mxu0 0.0
        %2084 = vmatpush2.msra.mxu0 0.0
        %2085 = vmatprep.subr.mxu0 0.0
        %2086 = vmatpush2.msra.mxu0 0.0
        %2087 = vmatprep.subr.mxu0 0.0
        %2088 = vmatpush2.msra.mxu0 0.0
        %2089 = vmatprep.subr.mxu0 0.0
        %2090 = vmatpush2.msra.mxu0 0.0
        %2091 = vmatprep.subr.mxu0 0.0
        %2092 = vmatpush2.msra.mxu0 0.0
        %2093 = vmatprep.subr.mxu0 0.0
        %2094 = vmatpush2.msra.mxu0 0.0
        %2095 = vmatprep.subr.mxu0 0.0
        %2096 = vmatpush2.msra.mxu0 0.0
        %2097 = vmatprep.subr.mxu0 0.0
        %2098 = vmatpush2.msra.mxu0 0.0
        %2099 = vmatprep.subr.mxu0 0.0
        %2100 = vmatpush2.msra.mxu0 0.0
        %2101 = vmatprep.subr.mxu0 0.0
        %2102 = vmatpush2.msra.mxu0 0.0
        %2103 = vmatprep.subr.mxu0 0.0
        %2104 = vmatpush2.msra.mxu0 0.0
        %2105 = vmatprep.subr.mxu0 0.0
        %2106 = vmatpush2.msra.mxu0 0.0
        %2107 = vmatprep.subr.mxu0 0.0
        %2108 = vmatpush2.msra.mxu0 0.0
        %2109 = vmatprep.mubr.f32.mxu0 0.0
        %2110 = vmatmul.mubr.f32.gmra.mxu0 %v2019
        %v2111 = vpop.f32.mrf.mxu0
        %v2112 = vadd.f32 %v2043, %v2111
        %v2113 = vpop.f32.mrf.mxu0
        %2114 = vdwg.mxu0
        %v2115 = vadd.f32 %v1928, %v2112
        %v2116 = vld [vmem:[%s13] sm:$0xff]
        %v2117 = vld [vmem:[%s13 + $0x8] sm:$0xff]
        %v2118 = vld [vmem:[%s13 + $0x10] sm:$0xff]
        %v2119 = vld [vmem:[%s13 + $0x18] sm:$0xff]
        %v2120 = vld [vmem:[%s13 + $0x20] sm:$0xff]
        %v2121 = vld [vmem:[%s13 + $0x28] sm:$0xff]
        %v2122 = vld [vmem:[%s13 + $0x30] sm:$0xff]
        %v2123 = vld [vmem:[%s13 + $0x38] sm:$0xff]
        %v2124 = vld [vmem:[%s14] sm:$0x1]
        %v2126 = vlaneseq
        %v2127 = vshrl.u32 %v2126, 7
        %v2128 = vsub.s32 0, %v2127
        %v2129 = vrot.slane %v2124, %v2128
        %v2132 = vsel %vm721, %v2115, 0
        %2134 = vmatprep.subr.mxu0 0.0
        %2135 = vmatpush1.msra.mxu0 0.0
        %2136 = vmatprep.subr.mxu0 0.0
        %2137 = vmatpush1.msra.mxu0 0.0
        %2138 = vmatprep.subr.mxu0 0.0
        %2139 = vmatpush1.msra.mxu0 0.0
        %2140 = vmatprep.subr.mxu0 0.0
        %2141 = vmatpush1.msra.mxu0 0.0
        %2142 = vmatprep.subr.mxu0 0.0
        %2143 = vmatpush1.msra.mxu0 0.0
        %2144 = vmatprep.subr.mxu0 0.0
        %2145 = vmatpush1.msra.mxu0 0.0
        %2146 = vmatprep.subr.mxu0 0.0
        %2147 = vmatpush1.msra.mxu0 0.0
        %2148 = vmatprep.subr.mxu0 0.0
        %2149 = vmatpush1.msra.mxu0 0.0
        %2150 = vmatprep.subr.mxu0 0.0
        %2151 = vmatpush1.msra.mxu0 %v2123
        %2152 = vmatprep.subr.mxu0 0.0
        %2153 = vmatpush1.msra.mxu0 %v2122
        %2154 = vmatprep.subr.mxu0 0.0
        %2155 = vmatpush1.msra.mxu0 %v2121
        %2156 = vmatprep.subr.mxu0 0.0
        %2157 = vmatpush1.msra.mxu0 %v2120
        %2158 = vmatprep.subr.mxu0 0.0
        %2159 = vmatpush1.msra.mxu0 %v2119
        %2160 = vmatprep.subr.mxu0 0.0
        %2161 = vmatpush1.msra.mxu0 %v2118
        %2162 = vmatprep.subr.mxu0 0.0
        %2163 = vmatpush1.msra.mxu0 %v2117
        %2164 = vmatprep.subr.mxu0 0.0
        %2165 = vmatpush1.msra.mxu0 %v2116
        %2166 = vmatprep.subr.mxu0 0.0
        %2167 = vmatpush2.msra.mxu0 0.0
        %2168 = vmatprep.subr.mxu0 0.0
        %2169 = vmatpush2.msra.mxu0 0.0
        %2170 = vmatprep.subr.mxu0 0.0
        %2171 = vmatpush2.msra.mxu0 0.0
        %2172 = vmatprep.subr.mxu0 0.0
        %2173 = vmatpush2.msra.mxu0 0.0
        %2174 = vmatprep.subr.mxu0 0.0
        %2175 = vmatpush2.msra.mxu0 0.0
        %2176 = vmatprep.subr.mxu0 0.0
        %2177 = vmatpush2.msra.mxu0 0.0
        %2178 = vmatprep.subr.mxu0 0.0
        %2179 = vmatpush2.msra.mxu0 0.0
        %2180 = vmatprep.subr.mxu0 0.0
        %2181 = vmatpush2.msra.mxu0 0.0
        %2182 = vmatprep.subr.mxu0 0.0
        %2183 = vmatpush2.msra.mxu0 0.0
        %2184 = vmatprep.subr.mxu0 0.0
        %2185 = vmatpush2.msra.mxu0 0.0
        %2186 = vmatprep.subr.mxu0 0.0
        %2187 = vmatpush2.msra.mxu0 0.0
        %2188 = vmatprep.subr.mxu0 0.0
        %2189 = vmatpush2.msra.mxu0 0.0
        %2190 = vmatprep.subr.mxu0 0.0
        %2191 = vmatpush2.msra.mxu0 0.0
        %2192 = vmatprep.subr.mxu0 0.0
        %2193 = vmatpush2.msra.mxu0 0.0
        %2194 = vmatprep.subr.mxu0 0.0
        %2195 = vmatpush2.msra.mxu0 0.0
        %2196 = vmatprep.subr.mxu0 0.0
        %2197 = vmatpush2.msra.mxu0 0.0
        %2198 = vmatprep.mubr.f32.mxu0 0.0
        %2199 = vmatmul.mubr.f32.gmra.mxu0 %v2132
        %v2200 = vpop.f32.mrf.mxu0
        %v2201 = vadd.f32 %v2129, %v2200
        %v2202 = vpop.f32.mrf.mxu0
        %2203 = vdwg.mxu0
        %v2204 = vmul.f32 %v2201, %v520
        %v2205 = vadd.f32 %v2204, %v511
        %vm2206 = vcmask 195584
        %2207 = vst.msk [vmem:[%s500] sm:$0xff] %vm2206, %v2205
        %s2208 = sand.u32 %s358, 1
        %s2209 = scalar_lea.sflag [#allocation4], %s2208
        %s2210 = sand.u32 %s358, 1
        %s2211 = smul.addr %s2210, 8
        %s2212 = scalar_lea.vmem [#allocation5], %s2211
        // Predicated region
        $region85: #{_lambda_.1} parent=79 // pred_check
          %p2213 = pneg %p368
        $region86: #{_lambda_.1} parent=79 // pred_check_branch
          %2215 = sbr.rel (%p2213) target = $region88
        $region87: #{_lambda_.1} parent=79 // pred_region
          %s2217 = ssub.s32 128, 128
          %2218 = vsyncadd %s2209, %s2217
          %s2219 = smul.addr %s30, 128
          %s2220 = scalar_lea.hbm %s15, %s2219
          %s2222 = sshll.u32 %s2212, 4
          %s2223 = int_to_ptr.vmem [resolvable:$true] %s2222
          %2225 = dma.vmem_to_hbm [thread:$0]  %s2223, 128, %s2220, %s2209
        $region88: #{_lambda_.1} parent=79 // pred_fallthru
          _
      $region80: #{_lambda_.1} parent=5 // pred_fallthru
        _
      %p2226 = scmp.le.s32.totalorder 2, %s25
      // Predicated region
      $region89: #{_lambda_.1} parent=5 // pred_check
        %p2227 = pneg %p2226
      $region90: #{_lambda_.1} parent=5 // pred_check_branch
        %2229 = sbr.rel (%p2227) target = $region92
      $region91: #{_lambda_.1} parent=5 // pred_region
        %s2230 = ssub.s32 %s25, 2
        // Predicated region
        $region93: #{_lambda_.1} parent=91 // pred_check
          %p2231 = pneg %p374
        $region94: #{_lambda_.1} parent=91 // pred_check_branch
          %2233 = sbr.rel (%p2231) target = $region96
        $region95: #{_lambda_.1} parent=91 // pred_region
          %s2234 = sand.u32 %s359, 1
          %s2235 = scalar_lea.sflag [#allocation4], %s2234
          %s2236 = sand.u32 %s359, 1
          %s2237 = smul.addr %s2236, 8
          %s2238 = scalar_lea.vmem [#allocation5], %s2237
          %2239 = dma.done %s2235, 128
        $region96: #{_lambda_.1} parent=91 // pred_fallthru
          _
      $region92: #{_lambda_.1} parent=5 // pred_fallthru
        _
    $region6: #{_lambda_.1} parent=1 // loop_footer
      %s29 = sadd.s32 1, %s25
    $region7: #{_lambda_.1} parent=1 // loop_footer_branch
      %24 = sbr.rel target = $region3
    $region8: #{_lambda_.1} parent=1 // loop_exit
      _
    %2240 = vsyncpa [#allocation3], 1
    %s2241 = scalar_lea.sflag [#allocation3], 1
    %2242 = vsyncpa %s2241, 1
    %2243 = vsyncpa [#allocation4], 1
    %s2244 = scalar_lea.sflag [#allocation4], 1
    %2245 = vsyncpa %s2244, 1

</llo_original>
